<compile_context>
chip_gen: v6e
topology: v6e:2x2x1
jax: 0.10.0
libtpu: 0.0.40
codegen_flags: <defaults>
</compile_context>

<pallas_src>
import functools
import math

import jax
import jax.numpy as jnp
from jax.experimental import pallas as pl
from jax.experimental.pallas import tpu as pltpu


def _layernorm(v, w, b, eps=1e-5):
    mu = jnp.mean(v, axis=-1, keepdims=True)
    var = jnp.mean(jnp.square(v - mu), axis=-1, keepdims=True)
    return (v - mu) * jax.lax.rsqrt(var + eps) * w + b


def dit_block_kernel(x_ref, cond_ref,
                     modw_ref, modb_ref,
                     ln1w_ref, ln1b_ref, ln2w_ref, ln2b_ref,
                     qkvw_ref, qkvb_ref,
                     lvw_ref, lvb_ref,
                     ff1w_ref, ff1b_ref, ff2w_ref, ff2b_ref,
                     out_ref,
                     *, nhead, emb_size, seq_len, batch_block, compute_dtype,
                     approx_recip):
    E, H, L, TB = emb_size, nhead, seq_len, batch_block
    HE = H * E
    N = TB * L
    cd = compute_dtype
    f32 = jnp.float32

    x = x_ref[...].astype(f32)                           # (N, E)

    # --- conditioning: single (N, 6E) MXU pass, cond loaded/cast once -------
    cond_c = cond_ref[...].astype(cd)
    mod = jnp.dot(cond_c, modw_ref[...],
                  preferred_element_type=f32) + modb_ref[...]
    gamma1 = mod[:, 0 * E:1 * E]
    beta1 = mod[:, 1 * E:2 * E]
    alpha1 = mod[:, 2 * E:3 * E]
    gamma2 = mod[:, 3 * E:4 * E]
    beta2 = mod[:, 4 * E:5 * E]
    alpha2 = mod[:, 5 * E:6 * E]

    # --- attention branch ----------------------------------------------------
    y = _layernorm(x, ln1w_ref[...], ln1b_ref[...])
    y = y * (1.0 + gamma1) + beta1

    # 1/sqrt(L) is already folded into the q columns of qkv_w / qkv_b.
    qkv = jnp.dot(y.astype(cd), qkvw_ref[...],
                  preferred_element_type=f32) + qkvb_ref[...]   # (N, 3*HE)

    # Per-head attention (batched over the TB batch elements in this block).
    # The output projection is accumulated per head into a single f32 (N, E)
    # accumulator: no (N, HE) scratch slab, no lane-offset masked stores, no
    # full (N, HE) reload before the lv matmul.
    # TODO(synk): flash-style (query-tiled, online-softmax) inner loop before
    # scaling L into the hundreds; today the (TB, L, L) scores must fit VMEM.
    # TODO(synk): for E < 128 the per-head lane slices below relayout — pad E
    # to 128 (or use a lane-dense packed layout / fori_loop over heads) there.
    acc = jnp.zeros((N, E), f32)
    for h in range(H):
        qh = qkv[:, h * E:(h + 1) * E].astype(cd).reshape(TB, L, E)
        kh = qkv[:, HE + h * E:HE + (h + 1) * E].astype(cd).reshape(TB, L, E)
        vh = (qkv[:, 2 * HE + h * E:2 * HE + (h + 1) * E]
              .astype(cd).reshape(TB, L, E))
        s = jnp.einsum('ble,bme->blm', qh, kh, preferred_element_type=f32)
        s = s - jnp.max(s, axis=-1, keepdims=True)
        p = jnp.exp(s)
        denom = jnp.sum(p, axis=-1, keepdims=True)
        if approx_recip:
            p = p * pl.reciprocal(denom, approx=True)   # EUP slot, bf16 path
        else:
            p = p / denom                               # exact for f32 check
        oh = jnp.einsum('blm,bme->ble', p.astype(cd), vh,
                        preferred_element_type=f32)
        # Output projection for this head: sublane-aligned lv_w row slice,
        # f32 accumulation across heads.
        acc = acc + jnp.dot(oh.reshape(N, E).astype(cd),
                            lvw_ref[h * E:(h + 1) * E, :],
                            preferred_element_type=f32)
    y = x + (acc + lvb_ref[...]) * alpha1

    # --- feed-forward branch -------------------------------------------------
    z = _layernorm(y, ln2w_ref[...], ln2b_ref[...])
    z = z * (1.0 + gamma2) + beta2
    z = jnp.dot(z.astype(cd), ff1w_ref[...],
                preferred_element_type=f32) + ff1b_ref[...]
    z = jnp.maximum(z, 0.0)
    z = jnp.dot(z.astype(cd), ff2w_ref[...],
                preferred_element_type=f32) + ff2b_ref[...]

    out_ref[...] = (y + z * alpha2).astype(out_ref.dtype)


# ---------------------------- wrapper helpers ---------------------------------
def _vmem_capacity_bytes():
    try:
        info = pltpu.get_tpu_info()
        cap = int(getattr(info, "vmem_capacity_bytes", 0) or 0)
        if cap > 0:
            return cap
    except Exception:
        pass
    return 64 * 1024 * 1024          # conservative (v7x-sized) fallback


def _pick_batch_block(B, L, row_cap):
    """Largest legal batch block.  Single full-array step whenever it fits
    (the grid is a serial loop on single-TC parts); otherwise the biggest
    divisor of B whose row count is sublane-aligned and under the cap,
    preferring MXU-friendly multiples of 256 / 128."""
    if B * L <= row_cap:
        return B
    cands = [tb for tb in range(B, 0, -1) if B % tb == 0 and tb * L <= row_cap]
    for mult in (256, 128, 8):
        for tb in cands:
            if (tb * L) % mult == 0:
                return tb
    return B   # no sublane-aligned split exists; fall back to the full block


def prepare_params(params, *, nhead, seq_len, compute_dtype=jnp.bfloat16):
    """One-time parameter preparation (do this at init, not per call):
    fold 1/sqrt(seq_len) into the q columns of the fused qkv weight/bias and
    cast the matmul weights to the compute dtype.  Biases / LayerNorm params
    stay f32 (they are applied after f32 accumulation)."""
    (mod_w, mod_b, ln1_w, ln1_b, ln2_w, ln2_b,
     qkv_w, qkv_b, lv_w, lv_b, ff1_w, ff1_b, ff2_w, ff2_b) = params
    cd = jnp.dtype(compute_dtype)
    E = ln1_w.shape[-1]
    HE = nhead * E
    scale = 1.0 / math.sqrt(seq_len)          # torch: 1/sqrt(q.size(2))
    col_scale = jnp.concatenate(
        [jnp.full((1, HE), scale, jnp.float32),
         jnp.ones((1, 2 * HE), jnp.float32)], axis=1)
    qkv_w = qkv_w * col_scale
    qkv_b = qkv_b * col_scale
    return (mod_w.astype(cd), mod_b, ln1_w, ln1_b, ln2_w, ln2_b,
            qkv_w.astype(cd), qkv_b, lv_w.astype(cd), lv_b,
            ff1_w.astype(cd), ff1_b, ff2_w.astype(cd), ff2_b)


def dit_block(x, cond, prepared_params, *, nhead, batch_block=None):
    """DiTBlock forward. x, cond: (B, L, E) float32. Returns (B, L, E)."""
    B, L, E = x.shape
    H = nhead
    HE = H * E

    (mod_w, mod_b, ln1_w, ln1_b, ln2_w, ln2_b,
     qkv_w, qkv_b, lv_w, lv_b, ff1_w, ff1_b, ff2_w, ff2_b) = prepared_params
    cd = jnp.dtype(mod_w.dtype)

    vmem_cap = _vmem_capacity_bytes()
    vmem_limit = max(32 * 1024 * 1024, min(vmem_cap * 3 // 4, 96 * 1024 * 1024))
    row_cap = 512 if vmem_cap <= 64 * 1024 * 1024 else 1024

    if batch_block is None:
        batch_block = _pick_batch_block(B, L, row_cap)
    assert B % batch_block == 0, (B, batch_block)
    TB = batch_block
    N = TB * L
    # (8,128) rule: a split block needs a sublane-aligned row count; the full
    # array block is always legal.
    assert TB == B or N % 8 == 0, ("split batch blocks need TB*L % 8 == 0",
                                   TB, L)

    x2 = x.reshape(B * L, E)
    cond2 = cond.reshape(B * L, E)

    # Grid-invariant weight blocks live fully in VMEM.  Their index maps are
    # constant, so double-buffering is pure VMEM waste — single-buffer them
    # once they are big enough to matter (always true at production E).
    weight_bytes = sum(int(w.size) * w.dtype.itemsize
                       for w in (mod_w, qkv_w, lv_w, ff1_w, ff2_w))
    single_buffer_weights = 2 * weight_bytes > 8 * 1024 * 1024

    def wspec(shape):
        nd = len(shape)
        index_map = lambda i, _nd=nd: (0,) * _nd
        if single_buffer_weights:
            return pl.BlockSpec(shape, index_map, pipeline_mode=pl.Buffered(1))
        return pl.BlockSpec(shape, index_map)

    kernel = functools.partial(
        dit_block_kernel, nhead=H, emb_size=E, seq_len=L, batch_block=TB,
        compute_dtype=cd, approx_recip=(cd != jnp.float32))

    # Advisory cost estimate so XLA schedules around the custom call sensibly.
    flops = int(
        2 * B * L * E * 6 * E            # conditioning projections
        + 2 * B * L * E * 3 * HE         # qkv
        + 4 * B * H * L * L * E          # q@k^T and p@v
        + 2 * B * L * HE * E             # output projection (lv)
        + 2 * B * L * E * 4 * E          # ff1
        + 2 * B * L * 4 * E * E)         # ff2
    transcendentals = int(B * H * L * L + B * H * L + 2 * B * L)
    b_bytes = 4 * sum(int(b.size) for b in (mod_b, qkv_b, lv_b, ff1_b, ff2_b,
                                            ln1_w, ln1_b, ln2_w, ln2_b))
    bytes_accessed = int(3 * B * L * E * x.dtype.itemsize
                         + weight_bytes + b_bytes)

    # TODO(synk): use pltpu.CORE_PARALLEL on v7x (2 TCs/chip) to actually
    # shard the batch-block axis across cores; plain "parallel" does not.
    out2 = pl.pallas_call(
        kernel,
        out_shape=jax.ShapeDtypeStruct((B * L, E), x.dtype),
        grid_spec=pltpu.PrefetchScalarGridSpec(
            num_scalar_prefetch=0,
            grid=(B // TB,),
            in_specs=[
                pl.BlockSpec((N, E), lambda i: (i, 0)),   # x     (flattened)
                pl.BlockSpec((N, E), lambda i: (i, 0)),   # cond  (flattened)
                wspec((E, 6 * E)),      # mod_w  [g1|b1|a1|g2|b2|a2]
                wspec((1, 6 * E)),      # mod_b
                wspec((1, E)),          # ln1_w
                wspec((1, E)),          # ln1_b
                wspec((1, E)),          # ln2_w
                wspec((1, E)),          # ln2_b
                wspec((E, 3 * HE)),     # qkv_w [q|k|v], 1/sqrt(L) folded in q
                wspec((1, 3 * HE)),     # qkv_b
                wspec((HE, E)),         # lv_w
                wspec((1, E)),          # lv_b
                wspec((E, 4 * E)),      # ff1_w
                wspec((1, 4 * E)),      # ff1_b
                wspec((4 * E, E)),      # ff2_w
                wspec((1, E)),          # ff2_b
            ],
            out_specs=pl.BlockSpec((N, E), lambda i: (i, 0)),
        ),
        compiler_params=pltpu.CompilerParams(
            dimension_semantics=("parallel",),
            vmem_limit_bytes=vmem_limit),
        cost_estimate=pl.CostEstimate(flops=flops,
                                      transcendentals=transcendentals,
                                      bytes_accessed=bytes_accessed),
    )(x2, cond2,
      mod_w, mod_b, ln1_w, ln1_b, ln2_w, ln2_b,
      qkv_w, qkv_b, lv_w, lv_b, ff1_w, ff1_b, ff2_w, ff2_b)

    # TODO(synk): for E < 128 present a lane-dense output (pad E or pack to
    # (N*E/128, 128)) to avoid masked partial stores on the last dim.
    return out2.reshape(B, L, E)


# ----------------------------- parameter setup -------------------------------
def init_params(key, emb_size, nhead):
    E, HE = emb_size, nhead * emb_size

    def linear(key, fan_in, fan_out):
        kw, kb = jax.random.split(key)
        bound = 1.0 / math.sqrt(fan_in)
        w = jax.random.uniform(kw, (fan_in, fan_out), jnp.float32,
                               -bound, bound)
        b = jax.random.uniform(kb, (1, fan_out), jnp.float32, -bound, bound)
        return w, b

    keys = jax.random.split(key, 12)
    # gamma1, beta1, alpha1, gamma2, beta2, alpha2 fused along the output dim.
    mod_ws, mod_bs = [], []
    for i in range(6):
        w, b = linear(keys[i], E, E)
        mod_ws.append(w)
        mod_bs.append(b)
    mod_w = jnp.concatenate(mod_ws, axis=1)           # (E, 6E)
    mod_b = jnp.concatenate(mod_bs, axis=1)           # (1, 6E)

    ln1_w = jnp.ones((1, E), jnp.float32)
    ln1_b = jnp.zeros((1, E), jnp.float32)
    ln2_w = jnp.ones((1, E), jnp.float32)
    ln2_b = jnp.zeros((1, E), jnp.float32)

    wq_w, wq_b = linear(keys[6], E, HE)
    wk_w, wk_b = linear(keys[7], E, HE)
    wv_w, wv_b = linear(keys[8], E, HE)
    qkv_w = jnp.concatenate([wq_w, wk_w, wv_w], axis=1)   # (E, 3HE)
    qkv_b = jnp.concatenate([wq_b, wk_b, wv_b], axis=1)   # (1, 3HE)

    lv_w, lv_b = linear(keys[9], HE, E)
    ff1_w, ff1_b = linear(keys[10], E, 4 * E)
    ff2_w, ff2_b = linear(keys[11], 4 * E, E)

    return (mod_w, mod_b, ln1_w, ln1_b, ln2_w, ln2_b,
            qkv_w, qkv_b, lv_w, lv_b, ff1_w, ff1_b, ff2_w, ff2_b)


# ---------------------------- pure-JAX reference ------------------------------
def dit_block_ref(x, cond, params, *, nhead):
    (mod_w, mod_b, ln1_w, ln1_b, ln2_w, ln2_b,
     qkv_w, qkv_b, lv_w, lv_b, ff1_w, ff1_b, ff2_w, ff2_b) = params
    B, L, E = x.shape
    H = nhead
    HE = H * E

    mod = cond @ mod_w + mod_b
    g1, b1, a1, g2, b2, a2 = [mod[..., i * E:(i + 1) * E] for i in range(6)]

    def ln(v, w, b):
        mu = v.mean(-1, keepdims=True)
        var = ((v - mu) ** 2).mean(-1, keepdims=True)
        return (v - mu) / jnp.sqrt(var + 1e-5) * w + b

    y = ln(x, ln1_w, ln1_b) * (1 + g1) + b1
    qkv = y @ qkv_w + qkv_b
    q, k, v = qkv[..., :HE], qkv[..., HE:2 * HE], qkv[..., 2 * HE:]
    q = q.reshape(B, L, H, E).transpose(0, 2, 1, 3)
    k = k.reshape(B, L, H, E).transpose(0, 2, 1, 3)
    v = v.reshape(B, L, H, E).transpose(0, 2, 1, 3)
    attn = jnp.einsum('bhqe,bhke->bhqk', q, k) / math.sqrt(L)
    attn = jax.nn.softmax(attn, axis=-1)
    o = jnp.einsum('bhqk,bhke->bhqe', attn, v)
    o = o.transpose(0, 2, 1, 3).reshape(B, L, HE)
    y = x + (o @ lv_w + lv_b) * a1
    z = ln(y, ln2_w, ln2_b) * (1 + g2) + b2
    z = jnp.maximum(z @ ff1_w + ff1_b, 0.0) @ ff2_w + ff2_b
    return y + z * a2


if __name__ == "__main__":
    B, L, E, H = 2, 8, 32, 2

    key = jax.random.PRNGKey(0)
    kx, kc, kp = jax.random.split(key, 3)
    x = jax.random.normal(kx, (B, L, E), jnp.float32)
    cond = jax.random.normal(kc, (B, L, E), jnp.float32)
    params = init_params(kp, E, H)

    ref = dit_block_ref(x, cond, params, nhead=H)

    # 1) f32 compute path (exact softmax divide): logic check vs plain-f32 ref.
    prep_f32 = prepare_params(params, nhead=H, seq_len=L,
                              compute_dtype=jnp.float32)
    out_f32 = jax.block_until_ready(dit_block(x, cond, prep_f32, nhead=H))
    assert out_f32.shape == (B, L, E)
    assert jnp.allclose(out_f32, ref, atol=2e-2, rtol=2e-2), \
        float(jnp.max(jnp.abs(out_f32 - ref)))

    # 2) production config: bf16 MXU operands (cast once in prepare_params),
    #    f32 accumulation, approx EUP reciprocal.  Loose sanity check vs f32.
    prep_bf16 = prepare_params(params, nhead=H, seq_len=L,
                               compute_dtype=jnp.bfloat16)
    out_bf16 = jax.block_until_ready(dit_block(x, cond, prep_bf16, nhead=H))
    assert out_bf16.shape == (B, L, E)
    assert jnp.allclose(out_bf16, ref, atol=2e-1, rtol=2e-1), \
        float(jnp.max(jnp.abs(out_bf16 - ref)))

    print("KERNEL_OK")
</pallas_src>

<mosaic_0001>
module attributes {stable_mosaic.version = 11 : i64} {
  func.func @dit_block_kernel(%arg0: i32, %arg1: memref<16x32xf32, #tpu.memory_space<vmem>>, %arg2: memref<16x32xf32, #tpu.memory_space<vmem>>, %arg3: memref<32x192xf32, #tpu.memory_space<vmem>>, %arg4: memref<1x192xf32, #tpu.memory_space<vmem>>, %arg5: memref<1x32xf32, #tpu.memory_space<vmem>>, %arg6: memref<1x32xf32, #tpu.memory_space<vmem>>, %arg7: memref<1x32xf32, #tpu.memory_space<vmem>>, %arg8: memref<1x32xf32, #tpu.memory_space<vmem>>, %arg9: memref<32x192xf32, #tpu.memory_space<vmem>>, %arg10: memref<1x192xf32, #tpu.memory_space<vmem>>, %arg11: memref<64x32xf32, #tpu.memory_space<vmem>>, %arg12: memref<1x32xf32, #tpu.memory_space<vmem>>, %arg13: memref<32x128xf32, #tpu.memory_space<vmem>>, %arg14: memref<1x128xf32, #tpu.memory_space<vmem>>, %arg15: memref<128x32xf32, #tpu.memory_space<vmem>>, %arg16: memref<1x32xf32, #tpu.memory_space<vmem>>, %arg17: memref<16x32xf32, #tpu.memory_space<vmem>>) attributes {dimension_semantics = [#tpu.dimension_semantics<parallel>], iteration_bounds = array<i64: 1>, scalar_prefetch = 0 : i64, scratch_operands = 0 : i64, tpu.core_type = #tpu.core_type<tc>, window_params = [{transform_indices = @transform_0, window_bounds = array<i64: 16, 32>}, {transform_indices = @transform_1, window_bounds = array<i64: 16, 32>}, {pipeline_mode = #tpu.pipeline_mode<synchronous>, transform_indices = @transform_2, window_bounds = array<i64: 32, 192>}, {pipeline_mode = #tpu.pipeline_mode<synchronous>, transform_indices = @transform_3, window_bounds = array<i64: 1, 192>}, {pipeline_mode = #tpu.pipeline_mode<synchronous>, transform_indices = @transform_4, window_bounds = array<i64: 1, 32>}, {pipeline_mode = #tpu.pipeline_mode<synchronous>, transform_indices = @transform_5, window_bounds = array<i64: 1, 32>}, {pipeline_mode = #tpu.pipeline_mode<synchronous>, transform_indices = @transform_6, window_bounds = array<i64: 1, 32>}, {pipeline_mode = #tpu.pipeline_mode<synchronous>, transform_indices = @transform_7, window_bounds = array<i64: 1, 32>}, {pipeline_mode = #tpu.pipeline_mode<synchronous>, transform_indices = @transform_8, window_bounds = array<i64: 32, 192>}, {pipeline_mode = #tpu.pipeline_mode<synchronous>, transform_indices = @transform_9, window_bounds = array<i64: 1, 192>}, {pipeline_mode = #tpu.pipeline_mode<synchronous>, transform_indices = @transform_10, window_bounds = array<i64: 64, 32>}, {pipeline_mode = #tpu.pipeline_mode<synchronous>, transform_indices = @transform_11, window_bounds = array<i64: 1, 32>}, {pipeline_mode = #tpu.pipeline_mode<synchronous>, transform_indices = @transform_12, window_bounds = array<i64: 32, 128>}, {pipeline_mode = #tpu.pipeline_mode<synchronous>, transform_indices = @transform_13, window_bounds = array<i64: 1, 128>}, {pipeline_mode = #tpu.pipeline_mode<synchronous>, transform_indices = @transform_14, window_bounds = array<i64: 128, 32>}, {pipeline_mode = #tpu.pipeline_mode<synchronous>, transform_indices = @transform_15, window_bounds = array<i64: 1, 32>}, {transform_indices = @transform_16, window_bounds = array<i64: 16, 32>}]} {
    %c0 = arith.constant 0 : index
    %c0_0 = arith.constant 0 : index
    %0 = vector.load %arg1[%c0, %c0_0] : memref<16x32xf32, #tpu.memory_space<vmem>>, vector<16x32xf32>
    %c0_1 = arith.constant 0 : index
    %c0_2 = arith.constant 0 : index
    %1 = vector.load %arg2[%c0_1, %c0_2] : memref<16x32xf32, #tpu.memory_space<vmem>>, vector<16x32xf32>
    %c0_3 = arith.constant 0 : index
    %c0_4 = arith.constant 0 : index
    %2 = vector.load %arg3[%c0_3, %c0_4] : memref<32x192xf32, #tpu.memory_space<vmem>>, vector<32x192xf32>
    %cst = arith.constant dense<0.000000e+00> : vector<16x192xf32>
    %3 = tpu.matmul %1, %2, %cst {dimension_numbers = #tpu.dot_dimension_numbers<[1], [0], [0], [1], [0, 0, 1, 1], [], []>} : vector<16x32xf32>, vector<32x192xf32>, vector<16x192xf32> -> vector<16x192xf32>
    %c0_5 = arith.constant 0 : index
    %c0_6 = arith.constant 0 : index
    %4 = vector.load %arg4[%c0_5, %c0_6] : memref<1x192xf32, #tpu.memory_space<vmem>>, vector<1x192xf32>
    %5 = vector.broadcast %4 : vector<1x192xf32> to vector<16x192xf32>
    %6 = arith.addf %3, %5 : vector<16x192xf32>
    %7 = vector.extract_strided_slice %6 {offsets = [0, 0], sizes = [16, 32], strides = [1, 1]} : vector<16x192xf32> to vector<16x32xf32>
    %8 = vector.extract_strided_slice %6 {offsets = [0, 32], sizes = [16, 32], strides = [1, 1]} : vector<16x192xf32> to vector<16x32xf32>
    %9 = vector.extract_strided_slice %6 {offsets = [0, 64], sizes = [16, 32], strides = [1, 1]} : vector<16x192xf32> to vector<16x32xf32>
    %10 = vector.extract_strided_slice %6 {offsets = [0, 96], sizes = [16, 32], strides = [1, 1]} : vector<16x192xf32> to vector<16x32xf32>
    %11 = vector.extract_strided_slice %6 {offsets = [0, 128], sizes = [16, 32], strides = [1, 1]} : vector<16x192xf32> to vector<16x32xf32>
    %12 = vector.extract_strided_slice %6 {offsets = [0, 160], sizes = [16, 32], strides = [1, 1]} : vector<16x192xf32> to vector<16x32xf32>
    %c0_7 = arith.constant 0 : index
    %c0_8 = arith.constant 0 : index
    %13 = vector.load %arg5[%c0_7, %c0_8] : memref<1x32xf32, #tpu.memory_space<vmem>>, vector<1x32xf32>
    %c0_9 = arith.constant 0 : index
    %c0_10 = arith.constant 0 : index
    %14 = vector.load %arg6[%c0_9, %c0_10] : memref<1x32xf32, #tpu.memory_space<vmem>>, vector<1x32xf32>
    %cst_11 = arith.constant dense<0.000000e+00> : vector<16xf32>
    %15 = vector.multi_reduction <add>, %0, %cst_11 [1] : vector<16x32xf32> to vector<16xf32>
    %16 = vector.shape_cast %15 : vector<16xf32> to vector<16x1xf32>
    %cst_12 = arith.constant 3.200000e+01 : f32
    %17 = vector.broadcast %cst_12 : f32 to vector<16x1xf32>
    %18 = arith.divf %16, %17 : vector<16x1xf32>
    %19 = vector.broadcast %18 : vector<16x1xf32> to vector<16x32xf32>
    %20 = arith.subf %0, %19 : vector<16x32xf32>
    %21 = arith.mulf %20, %20 : vector<16x32xf32>
    %cst_13 = arith.constant dense<0.000000e+00> : vector<16xf32>
    %22 = vector.multi_reduction <add>, %21, %cst_13 [1] : vector<16x32xf32> to vector<16xf32>
    %23 = vector.shape_cast %22 : vector<16xf32> to vector<16x1xf32>
    %cst_14 = arith.constant 3.200000e+01 : f32
    %24 = vector.broadcast %cst_14 : f32 to vector<16x1xf32>
    %25 = arith.divf %23, %24 : vector<16x1xf32>
    %26 = vector.broadcast %18 : vector<16x1xf32> to vector<16x32xf32>
    %27 = arith.subf %0, %26 : vector<16x32xf32>
    %cst_15 = arith.constant 9.99999974E-6 : f32
    %28 = vector.broadcast %cst_15 : f32 to vector<16x1xf32>
    %29 = arith.addf %25, %28 : vector<16x1xf32>
    %30 = math.rsqrt %29 : vector<16x1xf32>
    %31 = vector.broadcast %30 : vector<16x1xf32> to vector<16x32xf32>
    %32 = arith.mulf %27, %31 : vector<16x32xf32>
    %33 = vector.broadcast %13 : vector<1x32xf32> to vector<16x32xf32>
    %34 = arith.mulf %32, %33 : vector<16x32xf32>
    %35 = vector.broadcast %14 : vector<1x32xf32> to vector<16x32xf32>
    %36 = arith.addf %34, %35 : vector<16x32xf32>
    %cst_16 = arith.constant 1.000000e+00 : f32
    %37 = vector.broadcast %cst_16 : f32 to vector<16x32xf32>
    %38 = arith.addf %37, %7 : vector<16x32xf32>
    %39 = arith.mulf %36, %38 : vector<16x32xf32>
    %40 = arith.addf %39, %8 : vector<16x32xf32>
    %c0_17 = arith.constant 0 : index
    %c0_18 = arith.constant 0 : index
    %41 = vector.load %arg9[%c0_17, %c0_18] : memref<32x192xf32, #tpu.memory_space<vmem>>, vector<32x192xf32>
    %cst_19 = arith.constant dense<0.000000e+00> : vector<16x192xf32>
    %42 = tpu.matmul %40, %41, %cst_19 {dimension_numbers = #tpu.dot_dimension_numbers<[1], [0], [0], [1], [0, 0, 1, 1], [], []>} : vector<16x32xf32>, vector<32x192xf32>, vector<16x192xf32> -> vector<16x192xf32>
    %c0_20 = arith.constant 0 : index
    %c0_21 = arith.constant 0 : index
    %43 = vector.load %arg10[%c0_20, %c0_21] : memref<1x192xf32, #tpu.memory_space<vmem>>, vector<1x192xf32>
    %44 = vector.broadcast %43 : vector<1x192xf32> to vector<16x192xf32>
    %45 = arith.addf %42, %44 : vector<16x192xf32>
    %cst_22 = arith.constant 0.000000e+00 : f32
    %46 = vector.broadcast %cst_22 : f32 to vector<16x32xf32>
    %47 = vector.extract_strided_slice %45 {offsets = [0, 0], sizes = [16, 32], strides = [1, 1]} : vector<16x192xf32> to vector<16x32xf32>
    %48 = vector.shape_cast %47 : vector<16x32xf32> to vector<2x8x32xf32>
    %49 = vector.extract_strided_slice %45 {offsets = [0, 64], sizes = [16, 32], strides = [1, 1]} : vector<16x192xf32> to vector<16x32xf32>
    %50 = vector.shape_cast %49 : vector<16x32xf32> to vector<2x8x32xf32>
    %51 = vector.extract_strided_slice %45 {offsets = [0, 128], sizes = [16, 32], strides = [1, 1]} : vector<16x192xf32> to vector<16x32xf32>
    %52 = vector.shape_cast %51 : vector<16x32xf32> to vector<2x8x32xf32>
    "tpu.trace_start"() <{level = 10 : i32, message = "ble,bme->blm"}> : () -> ()
    %cst_23 = arith.constant dense<0.000000e+00> : vector<2x8x8xf32>
    %53 = tpu.matmul %48, %50, %cst_23 {dimension_numbers = #tpu.dot_dimension_numbers<[2], [2], [1], [1], [0, 0, 0, 1, 1, 1], [0], [0]>} : vector<2x8x32xf32>, vector<2x8x32xf32>, vector<2x8x8xf32> -> vector<2x8x8xf32>
    "tpu.trace_stop"() : () -> ()
    %cst_24 = arith.constant dense<0xFF800000> : vector<2x8xf32>
    %54 = vector.multi_reduction <maximumf>, %53, %cst_24 [2] : vector<2x8x8xf32> to vector<2x8xf32>
    %55 = vector.shape_cast %54 : vector<2x8xf32> to vector<2x8x1xf32>
    %56 = vector.broadcast %55 : vector<2x8x1xf32> to vector<2x8x8xf32>
    %57 = arith.subf %53, %56 : vector<2x8x8xf32>
    %58 = math.exp %57 : vector<2x8x8xf32>
    %cst_25 = arith.constant dense<0.000000e+00> : vector<2x8xf32>
    %59 = vector.multi_reduction <add>, %58, %cst_25 [2] : vector<2x8x8xf32> to vector<2x8xf32>
    %60 = vector.shape_cast %59 : vector<2x8xf32> to vector<2x8x1xf32>
    %61 = vector.broadcast %60 : vector<2x8x1xf32> to vector<2x8x8xf32>
    %62 = arith.divf %58, %61 : vector<2x8x8xf32>
    "tpu.trace_start"() <{level = 10 : i32, message = "blm,bme->ble"}> : () -> ()
    %cst_26 = arith.constant dense<0.000000e+00> : vector<2x8x32xf32>
    %63 = tpu.matmul %62, %52, %cst_26 {dimension_numbers = #tpu.dot_dimension_numbers<[2], [1], [1], [2], [0, 0, 0, 1, 1, 2], [0], [0]>} : vector<2x8x8xf32>, vector<2x8x32xf32>, vector<2x8x32xf32> -> vector<2x8x32xf32>
    "tpu.trace_stop"() : () -> ()
    %64 = vector.shape_cast %63 : vector<2x8x32xf32> to vector<16x32xf32>
    %c0_27 = arith.constant 0 : index
    %c0_28 = arith.constant 0 : index
    %65 = vector.load %arg11[%c0_27, %c0_28] : memref<64x32xf32, #tpu.memory_space<vmem>>, vector<32x32xf32>
    %cst_29 = arith.constant dense<0.000000e+00> : vector<16x32xf32>
    %66 = tpu.matmul %64, %65, %cst_29 {dimension_numbers = #tpu.dot_dimension_numbers<[1], [0], [0], [1], [0, 0, 1, 1], [], []>} : vector<16x32xf32>, vector<32x32xf32>, vector<16x32xf32> -> vector<16x32xf32>
    %67 = arith.addf %46, %66 : vector<16x32xf32>
    %68 = vector.extract_strided_slice %45 {offsets = [0, 32], sizes = [16, 32], strides = [1, 1]} : vector<16x192xf32> to vector<16x32xf32>
    %69 = vector.shape_cast %68 : vector<16x32xf32> to vector<2x8x32xf32>
    %70 = vector.extract_strided_slice %45 {offsets = [0, 96], sizes = [16, 32], strides = [1, 1]} : vector<16x192xf32> to vector<16x32xf32>
    %71 = vector.shape_cast %70 : vector<16x32xf32> to vector<2x8x32xf32>
    %72 = vector.extract_strided_slice %45 {offsets = [0, 160], sizes = [16, 32], strides = [1, 1]} : vector<16x192xf32> to vector<16x32xf32>
    %73 = vector.shape_cast %72 : vector<16x32xf32> to vector<2x8x32xf32>
    "tpu.trace_start"() <{level = 10 : i32, message = "ble,bme->blm"}> : () -> ()
    %cst_30 = arith.constant dense<0.000000e+00> : vector<2x8x8xf32>
    %74 = tpu.matmul %69, %71, %cst_30 {dimension_numbers = #tpu.dot_dimension_numbers<[2], [2], [1], [1], [0, 0, 0, 1, 1, 1], [0], [0]>} : vector<2x8x32xf32>, vector<2x8x32xf32>, vector<2x8x8xf32> -> vector<2x8x8xf32>
    "tpu.trace_stop"() : () -> ()
    %cst_31 = arith.constant dense<0xFF800000> : vector<2x8xf32>
    %75 = vector.multi_reduction <maximumf>, %74, %cst_31 [2] : vector<2x8x8xf32> to vector<2x8xf32>
    %76 = vector.shape_cast %75 : vector<2x8xf32> to vector<2x8x1xf32>
    %77 = vector.broadcast %76 : vector<2x8x1xf32> to vector<2x8x8xf32>
    %78 = arith.subf %74, %77 : vector<2x8x8xf32>
    %79 = math.exp %78 : vector<2x8x8xf32>
    %cst_32 = arith.constant dense<0.000000e+00> : vector<2x8xf32>
    %80 = vector.multi_reduction <add>, %79, %cst_32 [2] : vector<2x8x8xf32> to vector<2x8xf32>
    %81 = vector.shape_cast %80 : vector<2x8xf32> to vector<2x8x1xf32>
    %82 = vector.broadcast %81 : vector<2x8x1xf32> to vector<2x8x8xf32>
    %83 = arith.divf %79, %82 : vector<2x8x8xf32>
    "tpu.trace_start"() <{level = 10 : i32, message = "blm,bme->ble"}> : () -> ()
    %cst_33 = arith.constant dense<0.000000e+00> : vector<2x8x32xf32>
    %84 = tpu.matmul %83, %73, %cst_33 {dimension_numbers = #tpu.dot_dimension_numbers<[2], [1], [1], [2], [0, 0, 0, 1, 1, 2], [0], [0]>} : vector<2x8x8xf32>, vector<2x8x32xf32>, vector<2x8x32xf32> -> vector<2x8x32xf32>
    "tpu.trace_stop"() : () -> ()
    %85 = vector.shape_cast %84 : vector<2x8x32xf32> to vector<16x32xf32>
    %c32 = arith.constant 32 : index
    %c0_34 = arith.constant 0 : index
    %86 = vector.load %arg11[%c32, %c0_34] : memref<64x32xf32, #tpu.memory_space<vmem>>, vector<32x32xf32>
    %cst_35 = arith.constant dense<0.000000e+00> : vector<16x32xf32>
    %87 = tpu.matmul %85, %86, %cst_35 {dimension_numbers = #tpu.dot_dimension_numbers<[1], [0], [0], [1], [0, 0, 1, 1], [], []>} : vector<16x32xf32>, vector<32x32xf32>, vector<16x32xf32> -> vector<16x32xf32>
    %88 = arith.addf %67, %87 : vector<16x32xf32>
    %c0_36 = arith.constant 0 : index
    %c0_37 = arith.constant 0 : index
    %89 = vector.load %arg12[%c0_36, %c0_37] : memref<1x32xf32, #tpu.memory_space<vmem>>, vector<1x32xf32>
    %90 = vector.broadcast %89 : vector<1x32xf32> to vector<16x32xf32>
    %91 = arith.addf %88, %90 : vector<16x32xf32>
    %92 = arith.mulf %91, %9 : vector<16x32xf32>
    %93 = arith.addf %0, %92 : vector<16x32xf32>
    %c0_38 = arith.constant 0 : index
    %c0_39 = arith.constant 0 : index
    %94 = vector.load %arg7[%c0_38, %c0_39] : memref<1x32xf32, #tpu.memory_space<vmem>>, vector<1x32xf32>
    %c0_40 = arith.constant 0 : index
    %c0_41 = arith.constant 0 : index
    %95 = vector.load %arg8[%c0_40, %c0_41] : memref<1x32xf32, #tpu.memory_space<vmem>>, vector<1x32xf32>
    %cst_42 = arith.constant dense<0.000000e+00> : vector<16xf32>
    %96 = vector.multi_reduction <add>, %93, %cst_42 [1] : vector<16x32xf32> to vector<16xf32>
    %97 = vector.shape_cast %96 : vector<16xf32> to vector<16x1xf32>
    %cst_43 = arith.constant 3.200000e+01 : f32
    %98 = vector.broadcast %cst_43 : f32 to vector<16x1xf32>
    %99 = arith.divf %97, %98 : vector<16x1xf32>
    %100 = vector.broadcast %99 : vector<16x1xf32> to vector<16x32xf32>
    %101 = arith.subf %93, %100 : vector<16x32xf32>
    %102 = arith.mulf %101, %101 : vector<16x32xf32>
    %cst_44 = arith.constant dense<0.000000e+00> : vector<16xf32>
    %103 = vector.multi_reduction <add>, %102, %cst_44 [1] : vector<16x32xf32> to vector<16xf32>
    %104 = vector.shape_cast %103 : vector<16xf32> to vector<16x1xf32>
    %cst_45 = arith.constant 3.200000e+01 : f32
    %105 = vector.broadcast %cst_45 : f32 to vector<16x1xf32>
    %106 = arith.divf %104, %105 : vector<16x1xf32>
    %107 = vector.broadcast %99 : vector<16x1xf32> to vector<16x32xf32>
    %108 = arith.subf %93, %107 : vector<16x32xf32>
    %cst_46 = arith.constant 9.99999974E-6 : f32
    %109 = vector.broadcast %cst_46 : f32 to vector<16x1xf32>
    %110 = arith.addf %106, %109 : vector<16x1xf32>
    %111 = math.rsqrt %110 : vector<16x1xf32>
    %112 = vector.broadcast %111 : vector<16x1xf32> to vector<16x32xf32>
    %113 = arith.mulf %108, %112 : vector<16x32xf32>
    %114 = vector.broadcast %94 : vector<1x32xf32> to vector<16x32xf32>
    %115 = arith.mulf %113, %114 : vector<16x32xf32>
    %116 = vector.broadcast %95 : vector<1x32xf32> to vector<16x32xf32>
    %117 = arith.addf %115, %116 : vector<16x32xf32>
    %cst_47 = arith.constant 1.000000e+00 : f32
    %118 = vector.broadcast %cst_47 : f32 to vector<16x32xf32>
    %119 = arith.addf %118, %10 : vector<16x32xf32>
    %120 = arith.mulf %117, %119 : vector<16x32xf32>
    %121 = arith.addf %120, %11 : vector<16x32xf32>
    %c0_48 = arith.constant 0 : index
    %c0_49 = arith.constant 0 : index
    %122 = vector.load %arg13[%c0_48, %c0_49] : memref<32x128xf32, #tpu.memory_space<vmem>>, vector<32x128xf32>
    %cst_50 = arith.constant dense<0.000000e+00> : vector<16x128xf32>
    %123 = tpu.matmul %121, %122, %cst_50 {dimension_numbers = #tpu.dot_dimension_numbers<[1], [0], [0], [1], [0, 0, 1, 1], [], []>} : vector<16x32xf32>, vector<32x128xf32>, vector<16x128xf32> -> vector<16x128xf32>
    %c0_51 = arith.constant 0 : index
    %c0_52 = arith.constant 0 : index
    %124 = vector.load %arg14[%c0_51, %c0_52] : memref<1x128xf32, #tpu.memory_space<vmem>>, vector<1x128xf32>
    %125 = vector.broadcast %124 : vector<1x128xf32> to vector<16x128xf32>
    %126 = arith.addf %123, %125 : vector<16x128xf32>
    %cst_53 = arith.constant 0.000000e+00 : f32
    %127 = vector.broadcast %cst_53 : f32 to vector<16x128xf32>
    %128 = arith.maximumf %126, %127 : vector<16x128xf32>
    %c0_54 = arith.constant 0 : index
    %c0_55 = arith.constant 0 : index
    %129 = vector.load %arg15[%c0_54, %c0_55] : memref<128x32xf32, #tpu.memory_space<vmem>>, vector<128x32xf32>
    %cst_56 = arith.constant dense<0.000000e+00> : vector<16x32xf32>
    %130 = tpu.matmul %128, %129, %cst_56 {dimension_numbers = #tpu.dot_dimension_numbers<[1], [0], [0], [1], [0, 0, 1, 1], [], []>} : vector<16x128xf32>, vector<128x32xf32>, vector<16x32xf32> -> vector<16x32xf32>
    %c0_57 = arith.constant 0 : index
    %c0_58 = arith.constant 0 : index
    %131 = vector.load %arg16[%c0_57, %c0_58] : memref<1x32xf32, #tpu.memory_space<vmem>>, vector<1x32xf32>
    %132 = vector.broadcast %131 : vector<1x32xf32> to vector<16x32xf32>
    %133 = arith.addf %130, %132 : vector<16x32xf32>
    %134 = arith.mulf %133, %12 : vector<16x32xf32>
    %135 = arith.addf %93, %134 : vector<16x32xf32>
    %c0_59 = arith.constant 0 : index
    %c0_60 = arith.constant 0 : index
    %136 = vector.load %arg17[%c0_59, %c0_60] : memref<16x32xf32, #tpu.memory_space<vmem>>, vector<16x32xf32>
    tpu.vector_store %arg17[%c0_59, %c0_60], %135 {strides = array<i32>} : memref<16x32xf32, #tpu.memory_space<vmem>>, vector<16x32xf32>,
    return
  }
  func.func @transform_0(%arg0: i32) -> (i32, i32) {
    %c0_i32 = arith.constant 0 : i32
    %c0_i32_0 = arith.constant 0 : i32
    return %arg0, %c0_i32 : i32, i32
  }
  func.func @transform_1(%arg0: i32) -> (i32, i32) {
    %c0_i32 = arith.constant 0 : i32
    %c0_i32_0 = arith.constant 0 : i32
    return %arg0, %c0_i32 : i32, i32
  }
  func.func @transform_2(%arg0: i32) -> (i32, i32) {
    %c0_i32 = arith.constant 0 : i32
    %c0_i32_0 = arith.constant 0 : i32
    %c0_i32_1 = arith.constant 0 : i32
    return %c0_i32, %c0_i32_0 : i32, i32
  }
  func.func @transform_3(%arg0: i32) -> (i32, i32) {
    %c0_i32 = arith.constant 0 : i32
    %c0_i32_0 = arith.constant 0 : i32
    %c0_i32_1 = arith.constant 0 : i32
    return %c0_i32, %c0_i32_0 : i32, i32
  }
  func.func @transform_4(%arg0: i32) -> (i32, i32) {
    %c0_i32 = arith.constant 0 : i32
    %c0_i32_0 = arith.constant 0 : i32
    %c0_i32_1 = arith.constant 0 : i32
    return %c0_i32, %c0_i32_0 : i32, i32
  }
  func.func @transform_5(%arg0: i32) -> (i32, i32) {
    %c0_i32 = arith.constant 0 : i32
    %c0_i32_0 = arith.constant 0 : i32
    %c0_i32_1 = arith.constant 0 : i32
    return %c0_i32, %c0_i32_0 : i32, i32
  }
  func.func @transform_6(%arg0: i32) -> (i32, i32) {
    %c0_i32 = arith.constant 0 : i32
    %c0_i32_0 = arith.constant 0 : i32
    %c0_i32_1 = arith.constant 0 : i32
    return %c0_i32, %c0_i32_0 : i32, i32
  }
  func.func @transform_7(%arg0: i32) -> (i32, i32) {
    %c0_i32 = arith.constant 0 : i32
    %c0_i32_0 = arith.constant 0 : i32
    %c0_i32_1 = arith.constant 0 : i32
    return %c0_i32, %c0_i32_0 : i32, i32
  }
  func.func @transform_8(%arg0: i32) -> (i32, i32) {
    %c0_i32 = arith.constant 0 : i32
    %c0_i32_0 = arith.constant 0 : i32
    %c0_i32_1 = arith.constant 0 : i32
    return %c0_i32, %c0_i32_0 : i32, i32
  }
  func.func @transform_9(%arg0: i32) -> (i32, i32) {
    %c0_i32 = arith.constant 0 : i32
    %c0_i32_0 = arith.constant 0 : i32
    %c0_i32_1 = arith.constant 0 : i32
    return %c0_i32, %c0_i32_0 : i32, i32
  }
  func.func @transform_10(%arg0: i32) -> (i32, i32) {
    %c0_i32 = arith.constant 0 : i32
    %c0_i32_0 = arith.constant 0 : i32
    %c0_i32_1 = arith.constant 0 : i32
    return %c0_i32, %c0_i32_0 : i32, i32
  }
  func.func @transform_11(%arg0: i32) -> (i32, i32) {
    %c0_i32 = arith.constant 0 : i32
    %c0_i32_0 = arith.constant 0 : i32
    %c0_i32_1 = arith.constant 0 : i32
    return %c0_i32, %c0_i32_0 : i32, i32
  }
  func.func @transform_12(%arg0: i32) -> (i32, i32) {
    %c0_i32 = arith.constant 0 : i32
    %c0_i32_0 = arith.constant 0 : i32
    %c0_i32_1 = arith.constant 0 : i32
    return %c0_i32, %c0_i32_0 : i32, i32
  }
  func.func @transform_13(%arg0: i32) -> (i32, i32) {
    %c0_i32 = arith.constant 0 : i32
    %c0_i32_0 = arith.constant 0 : i32
    %c0_i32_1 = arith.constant 0 : i32
    return %c0_i32, %c0_i32_0 : i32, i32
  }
  func.func @transform_14(%arg0: i32) -> (i32, i32) {
    %c0_i32 = arith.constant 0 : i32
    %c0_i32_0 = arith.constant 0 : i32
    %c0_i32_1 = arith.constant 0 : i32
    return %c0_i32, %c0_i32_0 : i32, i32
  }
  func.func @transform_15(%arg0: i32) -> (i32, i32) {
    %c0_i32 = arith.constant 0 : i32
    %c0_i32_0 = arith.constant 0 : i32
    %c0_i32_1 = arith.constant 0 : i32
    return %c0_i32, %c0_i32_0 : i32, i32
  }
  func.func @transform_16(%arg0: i32) -> (i32, i32) {
    %c0_i32 = arith.constant 0 : i32
    %c0_i32_0 = arith.constant 0 : i32
    return %arg0, %c0_i32 : i32, i32
  }
}

</mosaic_0001>

<llo_original>
// kernel: tpu_custom_call.1
$region0: #{tpu_custom_call.1}
  #allocation0 [shape = 'u32[]', space=smem, size = 0x4, offset = 0x4, fixed_abs, tag = 'smem constant byte address 0x4 - core index']
  #allocation1 [shape = 'u32[144,128]{1,0:T(1,128)}', space=vmem, size = 0x12000, scoped, tag = 'internal scratch']
  %s0 = inlined_call_operand.vmem [shape: f32[16,32], index: 0, kind: input, shape index: {}]
  %s1 = inlined_call_operand.vmem [shape: f32[16,32], index: 1, kind: input, shape index: {}]
  %s2 = inlined_call_operand.vmem [shape: f32[32,192], index: 2, kind: input, shape index: {}]
  %s3 = inlined_call_operand.vmem [shape: f32[1,192], index: 3, kind: input, shape index: {}]
  %s4 = inlined_call_operand.vmem [shape: f32[1,32], index: 4, kind: input, shape index: {}]
  %s5 = inlined_call_operand.vmem [shape: f32[1,32], index: 5, kind: input, shape index: {}]
  %s6 = inlined_call_operand.vmem [shape: f32[1,32], index: 6, kind: input, shape index: {}]
  %s7 = inlined_call_operand.vmem [shape: f32[1,32], index: 7, kind: input, shape index: {}]
  %s8 = inlined_call_operand.vmem [shape: f32[32,192], index: 8, kind: input, shape index: {}]
  %s9 = inlined_call_operand.vmem [shape: f32[1,192], index: 9, kind: input, shape index: {}]
  %s10 = inlined_call_operand.vmem [shape: f32[64,32], index: 10, kind: input, shape index: {}]
  %s11 = inlined_call_operand.vmem [shape: f32[1,32], index: 11, kind: input, shape index: {}]
  %s12 = inlined_call_operand.vmem [shape: f32[32,128], index: 12, kind: input, shape index: {}]
  %s13 = inlined_call_operand.vmem [shape: f32[1,128], index: 13, kind: input, shape index: {}]
  %s14 = inlined_call_operand.vmem [shape: f32[128,32], index: 14, kind: input, shape index: {}]
  %s15 = inlined_call_operand.vmem [shape: f32[1,32], index: 15, kind: input, shape index: {}]
  %s16 = inlined_call_operand.hbm [shape: f32[16,32], index: 16, kind: output, shape index: {}]
  %s17 = sld [smem:[#allocation0]]
  $region74: #{tpu_custom_call.1} parent=0
    _
  %s19 = ssub.s32 1, %s17
  %s20 = scalar_select 0, %s19, %s17
  $region1: #{tpu_custom_call.1} parent=0
    #allocation2 [shape = 'u8[8192]{0}', space=vmem, size = 0x2000, scoped, tag = 'output window, operand 0, single buffered']
    #allocation3 [shape = 's32[1]{0}', space=sflag, size = 0x4, scoped, tag = 'scoped memory for tpu_custom_call.1']
    %21 = vsyncpa [#allocation3], 0
    // Predicated region
    $region2: #{tpu_custom_call.1} parent=1 // pred_check
      _
    $region3: #{tpu_custom_call.1} parent=1 // pred_check_branch
      %23 = sbr.rel (0) target = $region5
    $region4: #{tpu_custom_call.1} parent=1 // pred_region
      _
    $region5: #{tpu_custom_call.1} parent=1 // pred_fallthru
      _
    // Predicated region
    $region6: #{tpu_custom_call.1} parent=1 // pred_check
      _
    $region7: #{tpu_custom_call.1} parent=1 // pred_check_branch
      %25 = sbr.rel (0) target = $region9
    $region8: #{tpu_custom_call.1} parent=1 // pred_region
      _
    $region9: #{tpu_custom_call.1} parent=1 // pred_fallthru
      _
    // Predicated region
    $region10: #{tpu_custom_call.1} parent=1 // pred_check
      _
    $region11: #{tpu_custom_call.1} parent=1 // pred_check_branch
      %27 = sbr.rel (0) target = $region13
    $region12: #{tpu_custom_call.1} parent=1 // pred_region
      _
    $region13: #{tpu_custom_call.1} parent=1 // pred_fallthru
      _
    // Predicated region
    $region14: #{tpu_custom_call.1} parent=1 // pred_check
      _
    $region15: #{tpu_custom_call.1} parent=1 // pred_check_branch
      %29 = sbr.rel (0) target = $region17
    $region16: #{tpu_custom_call.1} parent=1 // pred_region
      _
    $region17: #{tpu_custom_call.1} parent=1 // pred_fallthru
      _
    // Predicated region
    $region18: #{tpu_custom_call.1} parent=1 // pred_check
      _
    $region19: #{tpu_custom_call.1} parent=1 // pred_check_branch
      %31 = sbr.rel (0) target = $region21
    $region20: #{tpu_custom_call.1} parent=1 // pred_region
      _
    $region21: #{tpu_custom_call.1} parent=1 // pred_fallthru
      _
    // Predicated region
    $region22: #{tpu_custom_call.1} parent=1 // pred_check
      _
    $region23: #{tpu_custom_call.1} parent=1 // pred_check_branch
      %33 = sbr.rel (0) target = $region25
    $region24: #{tpu_custom_call.1} parent=1 // pred_region
      _
    $region25: #{tpu_custom_call.1} parent=1 // pred_fallthru
      _
    // Predicated region
    $region26: #{tpu_custom_call.1} parent=1 // pred_check
      _
    $region27: #{tpu_custom_call.1} parent=1 // pred_check_branch
      %35 = sbr.rel (0) target = $region29
    $region28: #{tpu_custom_call.1} parent=1 // pred_region
      _
    $region29: #{tpu_custom_call.1} parent=1 // pred_fallthru
      _
    // Predicated region
    $region30: #{tpu_custom_call.1} parent=1 // pred_check
      _
    $region31: #{tpu_custom_call.1} parent=1 // pred_check_branch
      %37 = sbr.rel (0) target = $region33
    $region32: #{tpu_custom_call.1} parent=1 // pred_region
      _
    $region33: #{tpu_custom_call.1} parent=1 // pred_fallthru
      _
    // Predicated region
    $region34: #{tpu_custom_call.1} parent=1 // pred_check
      _
    $region35: #{tpu_custom_call.1} parent=1 // pred_check_branch
      %39 = sbr.rel (0) target = $region37
    $region36: #{tpu_custom_call.1} parent=1 // pred_region
      _
    $region37: #{tpu_custom_call.1} parent=1 // pred_fallthru
      _
    // Predicated region
    $region38: #{tpu_custom_call.1} parent=1 // pred_check
      _
    $region39: #{tpu_custom_call.1} parent=1 // pred_check_branch
      %41 = sbr.rel (0) target = $region41
    $region40: #{tpu_custom_call.1} parent=1 // pred_region
      _
    $region41: #{tpu_custom_call.1} parent=1 // pred_fallthru
      _
    // Predicated region
    $region42: #{tpu_custom_call.1} parent=1 // pred_check
      _
    $region43: #{tpu_custom_call.1} parent=1 // pred_check_branch
      %43 = sbr.rel (0) target = $region45
    $region44: #{tpu_custom_call.1} parent=1 // pred_region
      _
    $region45: #{tpu_custom_call.1} parent=1 // pred_fallthru
      _
    // Predicated region
    $region46: #{tpu_custom_call.1} parent=1 // pred_check
      _
    $region47: #{tpu_custom_call.1} parent=1 // pred_check_branch
      %45 = sbr.rel (0) target = $region49
    $region48: #{tpu_custom_call.1} parent=1 // pred_region
      _
    $region49: #{tpu_custom_call.1} parent=1 // pred_fallthru
      _
    // Predicated region
    $region50: #{tpu_custom_call.1} parent=1 // pred_check
      _
    $region51: #{tpu_custom_call.1} parent=1 // pred_check_branch
      %47 = sbr.rel (0) target = $region53
    $region52: #{tpu_custom_call.1} parent=1 // pred_region
      _
    $region53: #{tpu_custom_call.1} parent=1 // pred_fallthru
      _
    // Predicated region
    $region54: #{tpu_custom_call.1} parent=1 // pred_check
      _
    $region55: #{tpu_custom_call.1} parent=1 // pred_check_branch
      %49 = sbr.rel (0) target = $region57
    $region56: #{tpu_custom_call.1} parent=1 // pred_region
      _
    $region57: #{tpu_custom_call.1} parent=1 // pred_fallthru
      _
    // Predicated region
    $region58: #{tpu_custom_call.1} parent=1 // pred_check
      _
    $region59: #{tpu_custom_call.1} parent=1 // pred_check_branch
      %51 = sbr.rel (0) target = $region61
    $region60: #{tpu_custom_call.1} parent=1 // pred_region
      _
    $region61: #{tpu_custom_call.1} parent=1 // pred_fallthru
      _
    // Predicated region
    $region62: #{tpu_custom_call.1} parent=1 // pred_check
      _
    $region63: #{tpu_custom_call.1} parent=1 // pred_check_branch
      %53 = sbr.rel (0) target = $region65
    $region64: #{tpu_custom_call.1} parent=1 // pred_region
      _
    $region65: #{tpu_custom_call.1} parent=1 // pred_fallthru
      _
    %v54 = vld [vmem:[%s0] sm:$0xff]
    %v55 = vld [vmem:[%s0 + $0x8] sm:$0xff]
    %v56 = vld [vmem:[%s1] sm:$0xff]
    %v57 = vld [vmem:[%s1 + $0x8] sm:$0xff]
    %v58 = vld [vmem:[%s2] sm:$0xff]
    %v59 = vld [vmem:[%s2 + $0x8] sm:$0xff]
    %v60 = vld [vmem:[%s2 + $0x10] sm:$0xff]
    %v61 = vld [vmem:[%s2 + $0x18] sm:$0xff]
    %v62 = vld [vmem:[%s2 + $0x20] sm:$0xff]
    %v63 = vld [vmem:[%s2 + $0x28] sm:$0xff]
    %v64 = vld [vmem:[%s2 + $0x30] sm:$0xff]
    %v65 = vld [vmem:[%s2 + $0x38] sm:$0xff]
    %v66 = vld [vmem:[%s3] sm:$0x3]
    %v68 = vlaneseq
    %v69 = vshrl.u32 %v68, 7
    %v70 = vsub.s32 0, %v69
    %v71 = vrot.slane %v66, %v70
    %v72 = vlaneseq
    %v73 = vshrl.u32 %v72, 7
    %v74 = vsub.s32 1, %v73
    %v75 = vrot.slane %v66, %v74
    %vm78 = vcmask 261120
    %v80 = vsel %vm78, %v56, 0
    %v83 = vsel %vm78, %v57, 0
    %85 = vmatprep.subr.mxu0 0.0
    %86 = vmatpush1.msra.mxu0 0.0
    %87 = vmatprep.subr.mxu0 0.0
    %88 = vmatpush1.msra.mxu0 0.0
    %89 = vmatprep.subr.mxu0 0.0
    %90 = vmatpush1.msra.mxu0 0.0
    %91 = vmatprep.subr.mxu0 0.0
    %92 = vmatpush1.msra.mxu0 0.0
    %93 = vmatprep.subr.mxu0 0.0
    %94 = vmatpush1.msra.mxu0 0.0
    %95 = vmatprep.subr.mxu0 0.0
    %96 = vmatpush1.msra.mxu0 0.0
    %97 = vmatprep.subr.mxu0 0.0
    %98 = vmatpush1.msra.mxu0 0.0
    %99 = vmatprep.subr.mxu0 0.0
    %100 = vmatpush1.msra.mxu0 0.0
    %101 = vmatprep.subr.mxu0 0.0
    %102 = vmatpush1.msra.mxu0 0.0
    %103 = vmatprep.subr.mxu0 0.0
    %104 = vmatpush1.msra.mxu0 0.0
    %105 = vmatprep.subr.mxu0 0.0
    %106 = vmatpush1.msra.mxu0 0.0
    %107 = vmatprep.subr.mxu0 0.0
    %108 = vmatpush1.msra.mxu0 0.0
    %109 = vmatprep.subr.mxu0 %v65
    %110 = vmatpush1.msra.mxu0 %v64
    %111 = vmatprep.subr.mxu0 %v63
    %112 = vmatpush1.msra.mxu0 %v62
    %113 = vmatprep.subr.mxu0 %v61
    %114 = vmatpush1.msra.mxu0 %v60
    %115 = vmatprep.subr.mxu0 %v59
    %116 = vmatpush1.msra.mxu0 %v58
    %117 = vmatprep.subr.mxu0 0.0
    %118 = vmatpush2.msra.mxu0 0.0
    %119 = vmatprep.subr.mxu0 0.0
    %120 = vmatpush2.msra.mxu0 0.0
    %121 = vmatprep.subr.mxu0 0.0
    %122 = vmatpush2.msra.mxu0 0.0
    %123 = vmatprep.subr.mxu0 0.0
    %124 = vmatpush2.msra.mxu0 0.0
    %125 = vmatprep.subr.mxu0 0.0
    %126 = vmatpush2.msra.mxu0 0.0
    %127 = vmatprep.subr.mxu0 0.0
    %128 = vmatpush2.msra.mxu0 0.0
    %129 = vmatprep.subr.mxu0 0.0
    %130 = vmatpush2.msra.mxu0 0.0
    %131 = vmatprep.subr.mxu0 0.0
    %132 = vmatpush2.msra.mxu0 0.0
    %133 = vmatprep.subr.mxu0 0.0
    %134 = vmatpush2.msra.mxu0 0.0
    %135 = vmatprep.subr.mxu0 0.0
    %136 = vmatpush2.msra.mxu0 0.0
    %137 = vmatprep.subr.mxu0 0.0
    %138 = vmatpush2.msra.mxu0 0.0
    %139 = vmatprep.subr.mxu0 0.0
    %140 = vmatpush2.msra.mxu0 0.0
    %141 = vmatprep.subr.mxu0 0.0
    %142 = vmatpush2.msra.mxu0 0.0
    %143 = vmatprep.subr.mxu0 0.0
    %144 = vmatpush2.msra.mxu0 0.0
    %145 = vmatprep.subr.mxu0 0.0
    %146 = vmatpush2.msra.mxu0 0.0
    %147 = vmatprep.subr.mxu0 0.0
    %148 = vmatpush2.msra.mxu0 0.0
    %149 = vmatprep.mubr.f32.mxu0 0.0
    %150 = vmatmul.mubr.f32.gmra.mxu0 %v80
    %v151 = vpop.f32.mrf.mxu0
    %v152 = vadd.f32 %v71, %v151
    %v153 = vpop.f32.mrf.mxu0
    %v154 = vadd.f32 %v75, %v153
    %155 = vmatprep.mubr.f32.mxu0 0.0
    %156 = vmatmul.mubr.f32.gmra.mxu0 %v83
    %v157 = vpop.f32.mrf.mxu0
    %v158 = vadd.f32 %v71, %v157
    %v159 = vpop.f32.mrf.mxu0
    %v160 = vadd.f32 %v75, %v159
    %161 = vdwg.mxu0
    %v162 = vld [vmem:[%s4] sm:$0x1]
    %v163 = vld [vmem:[%s5] sm:$0x1]
    %v164 = vsel %vm78, %v54, 0.0
    %165 = vadd.xlane.f32.xlu0 %v164
    %v166 = vpop.xlane.xlu0 %165
    %v167 = vsel %vm78, %v55, 0.0
    %168 = vadd.xlane.f32.xlu0 %v167
    %v169 = vpop.xlane.xlu0 %168
    %v170 = vrcp.pop 32.0
    %v171 = vmul.f32 %v166, %v170
    %v172 = vmul.f32 %v169, %v170
    %v173 = vsub.f32 %v54, %v171
    %v174 = vsub.f32 %v55, %v172
    %v175 = vmul.f32 %v173, %v173
    %v176 = vmul.f32 %v174, %v174
    %v177 = vsel %vm78, %v175, 0.0
    %178 = vadd.xlane.f32.xlu0 %v177
    %v179 = vpop.xlane.xlu0 %178
    %v180 = vsel %vm78, %v176, 0.0
    %181 = vadd.xlane.f32.xlu0 %v180
    %v182 = vpop.xlane.xlu0 %181
    %v183 = vmul.f32 %v179, %v170
    %v184 = vmul.f32 %v182, %v170
    %v185 = vadd.f32 %v183, 1e-05
    %v186 = vadd.f32 %v184, 1e-05
    %v187 = vrsqrt.pop %v185
    %v188 = vrsqrt.pop %v186
    %v189 = vmul.f32 %v173, %v187
    %v190 = vmul.f32 %v174, %v188
    %v192 = vlaneseq
    %v193 = vshrl.u32 %v192, 7
    %v194 = vsub.s32 0, %v193
    %v195 = vrot.slane %v162, %v194
    %v197 = vmul.f32 %v189, %v195
    %v198 = vmul.f32 %v190, %v195
    %v200 = vlaneseq
    %v201 = vshrl.u32 %v200, 7
    %v202 = vsub.s32 0, %v201
    %v203 = vrot.slane %v163, %v202
    %v205 = vadd.f32 %v197, %v203
    %v206 = vadd.f32 %v198, %v203
    %v207 = vadd.f32 %v152, 1.0
    %v208 = vadd.f32 %v158, 1.0
    %v209 = vmul.f32 %v205, %v207
    %v210 = vmul.f32 %v206, %v208
    %213 = vrot.lane.b32.xlu0 %v152, 96
    %v214 = vpop.permute.xlu0 %213
    %215 = vrot.lane.b32.xlu0 %v158, 96
    %v216 = vpop.permute.xlu0 %215
    %v219 = vadd.f32 %v209, %v214
    %v220 = vadd.f32 %v210, %v216
    %v221 = vld [vmem:[%s8] sm:$0xff]
    %v222 = vld [vmem:[%s8 + $0x8] sm:$0xff]
    %v223 = vld [vmem:[%s8 + $0x10] sm:$0xff]
    %v224 = vld [vmem:[%s8 + $0x18] sm:$0xff]
    %v225 = vld [vmem:[%s8 + $0x20] sm:$0xff]
    %v226 = vld [vmem:[%s8 + $0x28] sm:$0xff]
    %v227 = vld [vmem:[%s8 + $0x30] sm:$0xff]
    %v228 = vld [vmem:[%s8 + $0x38] sm:$0xff]
    %v229 = vld [vmem:[%s9] sm:$0x3]
    %v231 = vlaneseq
    %v232 = vshrl.u32 %v231, 7
    %v233 = vsub.s32 0, %v232
    %v234 = vrot.slane %v229, %v233
    %v235 = vlaneseq
    %v236 = vshrl.u32 %v235, 7
    %v237 = vsub.s32 1, %v236
    %v238 = vrot.slane %v229, %v237
    %v242 = vsel %vm78, %v219, 0
    %v245 = vsel %vm78, %v220, 0
    %247 = vmatprep.subr.mxu0 0.0
    %248 = vmatpush1.msra.mxu0 0.0
    %249 = vmatprep.subr.mxu0 0.0
    %250 = vmatpush1.msra.mxu0 0.0
    %251 = vmatprep.subr.mxu0 0.0
    %252 = vmatpush1.msra.mxu0 0.0
    %253 = vmatprep.subr.mxu0 0.0
    %254 = vmatpush1.msra.mxu0 0.0
    %255 = vmatprep.subr.mxu0 0.0
    %256 = vmatpush1.msra.mxu0 0.0
    %257 = vmatprep.subr.mxu0 0.0
    %258 = vmatpush1.msra.mxu0 0.0
    %259 = vmatprep.subr.mxu0 0.0
    %260 = vmatpush1.msra.mxu0 0.0
    %261 = vmatprep.subr.mxu0 0.0
    %262 = vmatpush1.msra.mxu0 0.0
    %263 = vmatprep.subr.mxu0 0.0
    %264 = vmatpush1.msra.mxu0 0.0
    %265 = vmatprep.subr.mxu0 0.0
    %266 = vmatpush1.msra.mxu0 0.0
    %267 = vmatprep.subr.mxu0 0.0
    %268 = vmatpush1.msra.mxu0 0.0
    %269 = vmatprep.subr.mxu0 0.0
    %270 = vmatpush1.msra.mxu0 0.0
    %271 = vmatprep.subr.mxu0 %v228
    %272 = vmatpush1.msra.mxu0 %v227
    %273 = vmatprep.subr.mxu0 %v226
    %274 = vmatpush1.msra.mxu0 %v225
    %275 = vmatprep.subr.mxu0 %v224
    %276 = vmatpush1.msra.mxu0 %v223
    %277 = vmatprep.subr.mxu0 %v222
    %278 = vmatpush1.msra.mxu0 %v221
    %279 = vmatprep.subr.mxu0 0.0
    %280 = vmatpush2.msra.mxu0 0.0
    %281 = vmatprep.subr.mxu0 0.0
    %282 = vmatpush2.msra.mxu0 0.0
    %283 = vmatprep.subr.mxu0 0.0
    %284 = vmatpush2.msra.mxu0 0.0
    %285 = vmatprep.subr.mxu0 0.0
    %286 = vmatpush2.msra.mxu0 0.0
    %287 = vmatprep.subr.mxu0 0.0
    %288 = vmatpush2.msra.mxu0 0.0
    %289 = vmatprep.subr.mxu0 0.0
    %290 = vmatpush2.msra.mxu0 0.0
    %291 = vmatprep.subr.mxu0 0.0
    %292 = vmatpush2.msra.mxu0 0.0
    %293 = vmatprep.subr.mxu0 0.0
    %294 = vmatpush2.msra.mxu0 0.0
    %295 = vmatprep.subr.mxu0 0.0
    %296 = vmatpush2.msra.mxu0 0.0
    %297 = vmatprep.subr.mxu0 0.0
    %298 = vmatpush2.msra.mxu0 0.0
    %299 = vmatprep.subr.mxu0 0.0
    %300 = vmatpush2.msra.mxu0 0.0
    %301 = vmatprep.subr.mxu0 0.0
    %302 = vmatpush2.msra.mxu0 0.0
    %303 = vmatprep.subr.mxu0 0.0
    %304 = vmatpush2.msra.mxu0 0.0
    %305 = vmatprep.subr.mxu0 0.0
    %306 = vmatpush2.msra.mxu0 0.0
    %307 = vmatprep.subr.mxu0 0.0
    %308 = vmatpush2.msra.mxu0 0.0
    %309 = vmatprep.subr.mxu0 0.0
    %310 = vmatpush2.msra.mxu0 0.0
    %311 = vmatprep.mubr.f32.mxu0 0.0
    %312 = vmatmul.mubr.f32.gmra.mxu0 %v242
    %v313 = vpop.f32.mrf.mxu0
    %v314 = vadd.f32 %v234, %v313
    %v315 = vpop.f32.mrf.mxu0
    %v316 = vadd.f32 %v238, %v315
    %317 = vmatprep.mubr.f32.mxu0 0.0
    %318 = vmatmul.mubr.f32.gmra.mxu0 %v245
    %v319 = vpop.f32.mrf.mxu0
    %v320 = vadd.f32 %v234, %v319
    %v321 = vpop.f32.mrf.mxu0
    %v322 = vadd.f32 %v238, %v321
    %323 = vdwg.mxu0
    %325 = vrot.lane.b32.xlu0 %v314, 64
    %v326 = vpop.permute.xlu0 %325
    %v327 = vsel %vm78, %v314, 0
    %v329 = vsel %vm78, %v326, 0
    %331 = vmatprep.subr.mxu0 0.0
    %332 = vmatpush1.xpose.msra.mxu0 0.0
    %333 = vmatprep.subr.mxu0 0.0
    %334 = vmatpush1.xpose.msra.mxu0 0.0
    %335 = vmatprep.subr.mxu0 0.0
    %336 = vmatpush1.xpose.msra.mxu0 0.0
    %337 = vmatprep.subr.mxu0 0.0
    %338 = vmatpush1.xpose.msra.mxu0 0.0
    %339 = vmatprep.subr.mxu0 0.0
    %340 = vmatpush1.xpose.msra.mxu0 0.0
    %341 = vmatprep.subr.mxu0 0.0
    %342 = vmatpush1.xpose.msra.mxu0 0.0
    %343 = vmatprep.subr.mxu0 0.0
    %344 = vmatpush1.xpose.msra.mxu0 0.0
    %345 = vmatprep.subr.mxu0 0.0
    %346 = vmatpush1.xpose.msra.mxu0 0.0
    %347 = vmatprep.subr.mxu0 0.0
    %348 = vmatpush1.xpose.msra.mxu0 0.0
    %349 = vmatprep.subr.mxu0 0.0
    %350 = vmatpush1.xpose.msra.mxu0 0.0
    %351 = vmatprep.subr.mxu0 0.0
    %352 = vmatpush1.xpose.msra.mxu0 0.0
    %353 = vmatprep.subr.mxu0 0.0
    %354 = vmatpush1.xpose.msra.mxu0 0.0
    %355 = vmatprep.subr.mxu0 0.0
    %356 = vmatpush1.xpose.msra.mxu0 0.0
    %357 = vmatprep.subr.mxu0 0.0
    %358 = vmatpush1.xpose.msra.mxu0 0.0
    %359 = vmatprep.subr.mxu0 0.0
    %360 = vmatpush1.xpose.msra.mxu0 0.0
    %361 = vmatprep.subr.mxu0 0.0
    %362 = vmatpush1.xpose.msra.mxu0 %v329
    %363 = vmatprep.subr.mxu0 0.0
    %364 = vmatpush2.xpose.msra.mxu0 0.0
    %365 = vmatprep.subr.mxu0 0.0
    %366 = vmatpush2.xpose.msra.mxu0 0.0
    %367 = vmatprep.subr.mxu0 0.0
    %368 = vmatpush2.xpose.msra.mxu0 0.0
    %369 = vmatprep.subr.mxu0 0.0
    %370 = vmatpush2.xpose.msra.mxu0 0.0
    %371 = vmatprep.subr.mxu0 0.0
    %372 = vmatpush2.xpose.msra.mxu0 0.0
    %373 = vmatprep.subr.mxu0 0.0
    %374 = vmatpush2.xpose.msra.mxu0 0.0
    %375 = vmatprep.subr.mxu0 0.0
    %376 = vmatpush2.xpose.msra.mxu0 0.0
    %377 = vmatprep.subr.mxu0 0.0
    %378 = vmatpush2.xpose.msra.mxu0 0.0
    %379 = vmatprep.subr.mxu0 0.0
    %380 = vmatpush2.xpose.msra.mxu0 0.0
    %381 = vmatprep.subr.mxu0 0.0
    %382 = vmatpush2.xpose.msra.mxu0 0.0
    %383 = vmatprep.subr.mxu0 0.0
    %384 = vmatpush2.xpose.msra.mxu0 0.0
    %385 = vmatprep.subr.mxu0 0.0
    %386 = vmatpush2.xpose.msra.mxu0 0.0
    %387 = vmatprep.subr.mxu0 0.0
    %388 = vmatpush2.xpose.msra.mxu0 0.0
    %389 = vmatprep.subr.mxu0 0.0
    %390 = vmatpush2.xpose.msra.mxu0 0.0
    %391 = vmatprep.subr.mxu0 0.0
    %392 = vmatpush2.xpose.msra.mxu0 0.0
    %393 = vmatprep.subr.mxu0 0.0
    %394 = vmatpush2.xpose.msra.mxu0 0.0
    %395 = vmatprep.mubr.f32.mxu0 0.0
    %396 = vmatmul.mubr.f32.gmra.mxu0 %v327
    %v397 = vpop.f32.mrf.mxu0
    %v398 = vadd.f32 0.0, %v397
    %v399 = vpop.f32.mrf.mxu0
    %400 = vdwg.mxu0
    %402 = vrot.lane.b32.xlu0 %v320, 64
    %v403 = vpop.permute.xlu0 %402
    %v404 = vsel %vm78, %v320, 0
    %v406 = vsel %vm78, %v403, 0
    %408 = vmatprep.subr.mxu0 0.0
    %409 = vmatpush1.xpose.msra.mxu0 0.0
    %410 = vmatprep.subr.mxu0 0.0
    %411 = vmatpush1.xpose.msra.mxu0 0.0
    %412 = vmatprep.subr.mxu0 0.0
    %413 = vmatpush1.xpose.msra.mxu0 0.0
    %414 = vmatprep.subr.mxu0 0.0
    %415 = vmatpush1.xpose.msra.mxu0 0.0
    %416 = vmatprep.subr.mxu0 0.0
    %417 = vmatpush1.xpose.msra.mxu0 0.0
    %418 = vmatprep.subr.mxu0 0.0
    %419 = vmatpush1.xpose.msra.mxu0 0.0
    %420 = vmatprep.subr.mxu0 0.0
    %421 = vmatpush1.xpose.msra.mxu0 0.0
    %422 = vmatprep.subr.mxu0 0.0
    %423 = vmatpush1.xpose.msra.mxu0 0.0
    %424 = vmatprep.subr.mxu0 0.0
    %425 = vmatpush1.xpose.msra.mxu0 0.0
    %426 = vmatprep.subr.mxu0 0.0
    %427 = vmatpush1.xpose.msra.mxu0 0.0
    %428 = vmatprep.subr.mxu0 0.0
    %429 = vmatpush1.xpose.msra.mxu0 0.0
    %430 = vmatprep.subr.mxu0 0.0
    %431 = vmatpush1.xpose.msra.mxu0 0.0
    %432 = vmatprep.subr.mxu0 0.0
    %433 = vmatpush1.xpose.msra.mxu0 0.0
    %434 = vmatprep.subr.mxu0 0.0
    %435 = vmatpush1.xpose.msra.mxu0 0.0
    %436 = vmatprep.subr.mxu0 0.0
    %437 = vmatpush1.xpose.msra.mxu0 0.0
    %438 = vmatprep.subr.mxu0 0.0
    %439 = vmatpush1.xpose.msra.mxu0 %v406
    %440 = vmatprep.subr.mxu0 0.0
    %441 = vmatpush2.xpose.msra.mxu0 0.0
    %442 = vmatprep.subr.mxu0 0.0
    %443 = vmatpush2.xpose.msra.mxu0 0.0
    %444 = vmatprep.subr.mxu0 0.0
    %445 = vmatpush2.xpose.msra.mxu0 0.0
    %446 = vmatprep.subr.mxu0 0.0
    %447 = vmatpush2.xpose.msra.mxu0 0.0
    %448 = vmatprep.subr.mxu0 0.0
    %449 = vmatpush2.xpose.msra.mxu0 0.0
    %450 = vmatprep.subr.mxu0 0.0
    %451 = vmatpush2.xpose.msra.mxu0 0.0
    %452 = vmatprep.subr.mxu0 0.0
    %453 = vmatpush2.xpose.msra.mxu0 0.0
    %454 = vmatprep.subr.mxu0 0.0
    %455 = vmatpush2.xpose.msra.mxu0 0.0
    %456 = vmatprep.subr.mxu0 0.0
    %457 = vmatpush2.xpose.msra.mxu0 0.0
    %458 = vmatprep.subr.mxu0 0.0
    %459 = vmatpush2.xpose.msra.mxu0 0.0
    %460 = vmatprep.subr.mxu0 0.0
    %461 = vmatpush2.xpose.msra.mxu0 0.0
    %462 = vmatprep.subr.mxu0 0.0
    %463 = vmatpush2.xpose.msra.mxu0 0.0
    %464 = vmatprep.subr.mxu0 0.0
    %465 = vmatpush2.xpose.msra.mxu0 0.0
    %466 = vmatprep.subr.mxu0 0.0
    %467 = vmatpush2.xpose.msra.mxu0 0.0
    %468 = vmatprep.subr.mxu0 0.0
    %469 = vmatpush2.xpose.msra.mxu0 0.0
    %470 = vmatprep.subr.mxu0 0.0
    %471 = vmatpush2.xpose.msra.mxu0 0.0
    %472 = vmatprep.mubr.f32.mxu0 0.0
    %473 = vmatmul.mubr.f32.gmra.mxu0 %v404
    %v474 = vpop.f32.mrf.mxu0
    %v475 = vadd.f32 0.0, %v474
    %v476 = vpop.f32.mrf.mxu0
    %477 = vdwg.mxu0
    %vm478 = vcmask 64512
    %v479 = vsel %vm478, %v398, -inf
    %480 = vmax.xlane.f32.xlu0 %v479
    %v481 = vpop.xlane.xlu0 %480
    %v482 = vsel %vm478, %v475, -inf
    %483 = vmax.xlane.f32.xlu0 %v482
    %v484 = vpop.xlane.xlu0 %483
    %v485 = vsub.f32 %v398, %v481
    %v486 = vsub.f32 %v475, %v484
    %v487 = vmul.f32 %v485, 1.442695
    %v488 = vpow.pop %v487
    %v489 = vmul.f32 %v486, 1.442695
    %v490 = vpow.pop %v489
    %v491 = vsel %vm478, %v488, 0.0
    %492 = vadd.xlane.f32.xlu0 %v491
    %v493 = vpop.xlane.xlu0 %492
    %v494 = vsel %vm478, %v490, 0.0
    %495 = vadd.xlane.f32.xlu0 %v494
    %v496 = vpop.xlane.xlu0 %495
    %v497 = vrcp.pop %v493
    %v498 = vmul.f32 %v488, %v497
    %v499 = vrcp.pop %v496
    %v500 = vmul.f32 %v490, %v499
    %v502 = vsel %vm478, %v498, 0
    %504 = vmatprep.subr.mxu0 0.0
    %505 = vmatpush1.msra.mxu0 0.0
    %506 = vmatprep.subr.mxu0 0.0
    %507 = vmatpush1.msra.mxu0 0.0
    %508 = vmatprep.subr.mxu0 0.0
    %509 = vmatpush1.msra.mxu0 0.0
    %510 = vmatprep.subr.mxu0 0.0
    %511 = vmatpush1.msra.mxu0 0.0
    %512 = vmatprep.subr.mxu0 0.0
    %513 = vmatpush1.msra.mxu0 0.0
    %514 = vmatprep.subr.mxu0 0.0
    %515 = vmatpush1.msra.mxu0 0.0
    %516 = vmatprep.subr.mxu0 0.0
    %517 = vmatpush1.msra.mxu0 0.0
    %518 = vmatprep.subr.mxu0 0.0
    %519 = vmatpush1.msra.mxu0 0.0
    %520 = vmatprep.subr.mxu0 0.0
    %521 = vmatpush1.msra.mxu0 0.0
    %522 = vmatprep.subr.mxu0 0.0
    %523 = vmatpush1.msra.mxu0 0.0
    %524 = vmatprep.subr.mxu0 0.0
    %525 = vmatpush1.msra.mxu0 0.0
    %526 = vmatprep.subr.mxu0 0.0
    %527 = vmatpush1.msra.mxu0 0.0
    %528 = vmatprep.subr.mxu0 0.0
    %529 = vmatpush1.msra.mxu0 0.0
    %530 = vmatprep.subr.mxu0 0.0
    %531 = vmatpush1.msra.mxu0 0.0
    %532 = vmatprep.subr.mxu0 0.0
    %533 = vmatpush1.msra.mxu0 0.0
    %534 = vmatprep.subr.mxu0 0.0
    %535 = vmatpush1.msra.mxu0 %v316
    %536 = vmatprep.subr.mxu0 0.0
    %537 = vmatpush2.msra.mxu0 0.0
    %538 = vmatprep.subr.mxu0 0.0
    %539 = vmatpush2.msra.mxu0 0.0
    %540 = vmatprep.subr.mxu0 0.0
    %541 = vmatpush2.msra.mxu0 0.0
    %542 = vmatprep.subr.mxu0 0.0
    %543 = vmatpush2.msra.mxu0 0.0
    %544 = vmatprep.subr.mxu0 0.0
    %545 = vmatpush2.msra.mxu0 0.0
    %546 = vmatprep.subr.mxu0 0.0
    %547 = vmatpush2.msra.mxu0 0.0
    %548 = vmatprep.subr.mxu0 0.0
    %549 = vmatpush2.msra.mxu0 0.0
    %550 = vmatprep.subr.mxu0 0.0
    %551 = vmatpush2.msra.mxu0 0.0
    %552 = vmatprep.subr.mxu0 0.0
    %553 = vmatpush2.msra.mxu0 0.0
    %554 = vmatprep.subr.mxu0 0.0
    %555 = vmatpush2.msra.mxu0 0.0
    %556 = vmatprep.subr.mxu0 0.0
    %557 = vmatpush2.msra.mxu0 0.0
    %558 = vmatprep.subr.mxu0 0.0
    %559 = vmatpush2.msra.mxu0 0.0
    %560 = vmatprep.subr.mxu0 0.0
    %561 = vmatpush2.msra.mxu0 0.0
    %562 = vmatprep.subr.mxu0 0.0
    %563 = vmatpush2.msra.mxu0 0.0
    %564 = vmatprep.subr.mxu0 0.0
    %565 = vmatpush2.msra.mxu0 0.0
    %566 = vmatprep.subr.mxu0 0.0
    %567 = vmatpush2.msra.mxu0 0.0
    %568 = vmatprep.mubr.f32.mxu0 0.0
    %569 = vmatmul.mubr.f32.gmra.mxu0 %v502
    %v570 = vpop.f32.mrf.mxu0
    %v571 = vadd.f32 0.0, %v570
    %v572 = vpop.f32.mrf.mxu0
    %573 = vdwg.mxu0
    %v575 = vsel %vm478, %v500, 0
    %577 = vmatprep.subr.mxu0 0.0
    %578 = vmatpush1.msra.mxu0 0.0
    %579 = vmatprep.subr.mxu0 0.0
    %580 = vmatpush1.msra.mxu0 0.0
    %581 = vmatprep.subr.mxu0 0.0
    %582 = vmatpush1.msra.mxu0 0.0
    %583 = vmatprep.subr.mxu0 0.0
    %584 = vmatpush1.msra.mxu0 0.0
    %585 = vmatprep.subr.mxu0 0.0
    %586 = vmatpush1.msra.mxu0 0.0
    %587 = vmatprep.subr.mxu0 0.0
    %588 = vmatpush1.msra.mxu0 0.0
    %589 = vmatprep.subr.mxu0 0.0
    %590 = vmatpush1.msra.mxu0 0.0
    %591 = vmatprep.subr.mxu0 0.0
    %592 = vmatpush1.msra.mxu0 0.0
    %593 = vmatprep.subr.mxu0 0.0
    %594 = vmatpush1.msra.mxu0 0.0
    %595 = vmatprep.subr.mxu0 0.0
    %596 = vmatpush1.msra.mxu0 0.0
    %597 = vmatprep.subr.mxu0 0.0
    %598 = vmatpush1.msra.mxu0 0.0
    %599 = vmatprep.subr.mxu0 0.0
    %600 = vmatpush1.msra.mxu0 0.0
    %601 = vmatprep.subr.mxu0 0.0
    %602 = vmatpush1.msra.mxu0 0.0
    %603 = vmatprep.subr.mxu0 0.0
    %604 = vmatpush1.msra.mxu0 0.0
    %605 = vmatprep.subr.mxu0 0.0
    %606 = vmatpush1.msra.mxu0 0.0
    %607 = vmatprep.subr.mxu0 0.0
    %608 = vmatpush1.msra.mxu0 %v322
    %609 = vmatprep.subr.mxu0 0.0
    %610 = vmatpush2.msra.mxu0 0.0
    %611 = vmatprep.subr.mxu0 0.0
    %612 = vmatpush2.msra.mxu0 0.0
    %613 = vmatprep.subr.mxu0 0.0
    %614 = vmatpush2.msra.mxu0 0.0
    %615 = vmatprep.subr.mxu0 0.0
    %616 = vmatpush2.msra.mxu0 0.0
    %617 = vmatprep.subr.mxu0 0.0
    %618 = vmatpush2.msra.mxu0 0.0
    %619 = vmatprep.subr.mxu0 0.0
    %620 = vmatpush2.msra.mxu0 0.0
    %621 = vmatprep.subr.mxu0 0.0
    %622 = vmatpush2.msra.mxu0 0.0
    %623 = vmatprep.subr.mxu0 0.0
    %624 = vmatpush2.msra.mxu0 0.0
    %625 = vmatprep.subr.mxu0 0.0
    %626 = vmatpush2.msra.mxu0 0.0
    %627 = vmatprep.subr.mxu0 0.0
    %628 = vmatpush2.msra.mxu0 0.0
    %629 = vmatprep.subr.mxu0 0.0
    %630 = vmatpush2.msra.mxu0 0.0
    %631 = vmatprep.subr.mxu0 0.0
    %632 = vmatpush2.msra.mxu0 0.0
    %633 = vmatprep.subr.mxu0 0.0
    %634 = vmatpush2.msra.mxu0 0.0
    %635 = vmatprep.subr.mxu0 0.0
    %636 = vmatpush2.msra.mxu0 0.0
    %637 = vmatprep.subr.mxu0 0.0
    %638 = vmatpush2.msra.mxu0 0.0
    %639 = vmatprep.subr.mxu0 0.0
    %640 = vmatpush2.msra.mxu0 0.0
    %641 = vmatprep.mubr.f32.mxu0 0.0
    %642 = vmatmul.mubr.f32.gmra.mxu0 %v575
    %v643 = vpop.f32.mrf.mxu0
    %v644 = vadd.f32 0.0, %v643
    %v645 = vpop.f32.mrf.mxu0
    %646 = vdwg.mxu0
    %v647 = vld [vmem:[%s10] sm:$0xff]
    %v648 = vld [vmem:[%s10 + $0x8] sm:$0xff]
    %v649 = vld [vmem:[%s10 + $0x10] sm:$0xff]
    %v650 = vld [vmem:[%s10 + $0x18] sm:$0xff]
    %651 = vrot.lane.b32.xlu0 %v314, 96
    %v652 = vpop.permute.xlu0 %651
    %653 = vrot.lane.b32.xlu0 %v314, 32
    %v654 = vpop.permute.xlu0 %653
    %v655 = vsel %vm78, %v652, 0
    %v657 = vsel %vm78, %v654, 0
    %659 = vmatprep.subr.mxu0 0.0
    %660 = vmatpush1.xpose.msra.mxu0 0.0
    %661 = vmatprep.subr.mxu0 0.0
    %662 = vmatpush1.xpose.msra.mxu0 0.0
    %663 = vmatprep.subr.mxu0 0.0
    %664 = vmatpush1.xpose.msra.mxu0 0.0
    %665 = vmatprep.subr.mxu0 0.0
    %666 = vmatpush1.xpose.msra.mxu0 0.0
    %667 = vmatprep.subr.mxu0 0.0
    %668 = vmatpush1.xpose.msra.mxu0 0.0
    %669 = vmatprep.subr.mxu0 0.0
    %670 = vmatpush1.xpose.msra.mxu0 0.0
    %671 = vmatprep.subr.mxu0 0.0
    %672 = vmatpush1.xpose.msra.mxu0 0.0
    %673 = vmatprep.subr.mxu0 0.0
    %674 = vmatpush1.xpose.msra.mxu0 0.0
    %675 = vmatprep.subr.mxu0 0.0
    %676 = vmatpush1.xpose.msra.mxu0 0.0
    %677 = vmatprep.subr.mxu0 0.0
    %678 = vmatpush1.xpose.msra.mxu0 0.0
    %679 = vmatprep.subr.mxu0 0.0
    %680 = vmatpush1.xpose.msra.mxu0 0.0
    %681 = vmatprep.subr.mxu0 0.0
    %682 = vmatpush1.xpose.msra.mxu0 0.0
    %683 = vmatprep.subr.mxu0 0.0
    %684 = vmatpush1.xpose.msra.mxu0 0.0
    %685 = vmatprep.subr.mxu0 0.0
    %686 = vmatpush1.xpose.msra.mxu0 0.0
    %687 = vmatprep.subr.mxu0 0.0
    %688 = vmatpush1.xpose.msra.mxu0 0.0
    %689 = vmatprep.subr.mxu0 0.0
    %690 = vmatpush1.xpose.msra.mxu0 %v657
    %691 = vmatprep.subr.mxu0 0.0
    %692 = vmatpush2.xpose.msra.mxu0 0.0
    %693 = vmatprep.subr.mxu0 0.0
    %694 = vmatpush2.xpose.msra.mxu0 0.0
    %695 = vmatprep.subr.mxu0 0.0
    %696 = vmatpush2.xpose.msra.mxu0 0.0
    %697 = vmatprep.subr.mxu0 0.0
    %698 = vmatpush2.xpose.msra.mxu0 0.0
    %699 = vmatprep.subr.mxu0 0.0
    %700 = vmatpush2.xpose.msra.mxu0 0.0
    %701 = vmatprep.subr.mxu0 0.0
    %702 = vmatpush2.xpose.msra.mxu0 0.0
    %703 = vmatprep.subr.mxu0 0.0
    %704 = vmatpush2.xpose.msra.mxu0 0.0
    %705 = vmatprep.subr.mxu0 0.0
    %706 = vmatpush2.xpose.msra.mxu0 0.0
    %707 = vmatprep.subr.mxu0 0.0
    %708 = vmatpush2.xpose.msra.mxu0 0.0
    %709 = vmatprep.subr.mxu0 0.0
    %710 = vmatpush2.xpose.msra.mxu0 0.0
    %711 = vmatprep.subr.mxu0 0.0
    %712 = vmatpush2.xpose.msra.mxu0 0.0
    %713 = vmatprep.subr.mxu0 0.0
    %714 = vmatpush2.xpose.msra.mxu0 0.0
    %715 = vmatprep.subr.mxu0 0.0
    %716 = vmatpush2.xpose.msra.mxu0 0.0
    %717 = vmatprep.subr.mxu0 0.0
    %718 = vmatpush2.xpose.msra.mxu0 0.0
    %719 = vmatprep.subr.mxu0 0.0
    %720 = vmatpush2.xpose.msra.mxu0 0.0
    %721 = vmatprep.subr.mxu0 0.0
    %722 = vmatpush2.xpose.msra.mxu0 0.0
    %723 = vmatprep.mubr.f32.mxu0 0.0
    %724 = vmatmul.mubr.f32.gmra.mxu0 %v655
    %v725 = vpop.f32.mrf.mxu0
    %v726 = vadd.f32 0.0, %v725
    %v727 = vpop.f32.mrf.mxu0
    %728 = vdwg.mxu0
    %729 = vrot.lane.b32.xlu0 %v320, 96
    %v730 = vpop.permute.xlu0 %729
    %731 = vrot.lane.b32.xlu0 %v320, 32
    %v732 = vpop.permute.xlu0 %731
    %v733 = vsel %vm78, %v730, 0
    %v735 = vsel %vm78, %v732, 0
    %737 = vmatprep.subr.mxu0 0.0
    %738 = vmatpush1.xpose.msra.mxu0 0.0
    %739 = vmatprep.subr.mxu0 0.0
    %740 = vmatpush1.xpose.msra.mxu0 0.0
    %741 = vmatprep.subr.mxu0 0.0
    %742 = vmatpush1.xpose.msra.mxu0 0.0
    %743 = vmatprep.subr.mxu0 0.0
    %744 = vmatpush1.xpose.msra.mxu0 0.0
    %745 = vmatprep.subr.mxu0 0.0
    %746 = vmatpush1.xpose.msra.mxu0 0.0
    %747 = vmatprep.subr.mxu0 0.0
    %748 = vmatpush1.xpose.msra.mxu0 0.0
    %749 = vmatprep.subr.mxu0 0.0
    %750 = vmatpush1.xpose.msra.mxu0 0.0
    %751 = vmatprep.subr.mxu0 0.0
    %752 = vmatpush1.xpose.msra.mxu0 0.0
    %753 = vmatprep.subr.mxu0 0.0
    %754 = vmatpush1.xpose.msra.mxu0 0.0
    %755 = vmatprep.subr.mxu0 0.0
    %756 = vmatpush1.xpose.msra.mxu0 0.0
    %757 = vmatprep.subr.mxu0 0.0
    %758 = vmatpush1.xpose.msra.mxu0 0.0
    %759 = vmatprep.subr.mxu0 0.0
    %760 = vmatpush1.xpose.msra.mxu0 0.0
    %761 = vmatprep.subr.mxu0 0.0
    %762 = vmatpush1.xpose.msra.mxu0 0.0
    %763 = vmatprep.subr.mxu0 0.0
    %764 = vmatpush1.xpose.msra.mxu0 0.0
    %765 = vmatprep.subr.mxu0 0.0
    %766 = vmatpush1.xpose.msra.mxu0 0.0
    %767 = vmatprep.subr.mxu0 0.0
    %768 = vmatpush1.xpose.msra.mxu0 %v735
    %769 = vmatprep.subr.mxu0 0.0
    %770 = vmatpush2.xpose.msra.mxu0 0.0
    %771 = vmatprep.subr.mxu0 0.0
    %772 = vmatpush2.xpose.msra.mxu0 0.0
    %773 = vmatprep.subr.mxu0 0.0
    %774 = vmatpush2.xpose.msra.mxu0 0.0
    %775 = vmatprep.subr.mxu0 0.0
    %776 = vmatpush2.xpose.msra.mxu0 0.0
    %777 = vmatprep.subr.mxu0 0.0
    %778 = vmatpush2.xpose.msra.mxu0 0.0
    %779 = vmatprep.subr.mxu0 0.0
    %780 = vmatpush2.xpose.msra.mxu0 0.0
    %781 = vmatprep.subr.mxu0 0.0
    %782 = vmatpush2.xpose.msra.mxu0 0.0
    %783 = vmatprep.subr.mxu0 0.0
    %784 = vmatpush2.xpose.msra.mxu0 0.0
    %785 = vmatprep.subr.mxu0 0.0
    %786 = vmatpush2.xpose.msra.mxu0 0.0
    %787 = vmatprep.subr.mxu0 0.0
    %788 = vmatpush2.xpose.msra.mxu0 0.0
    %789 = vmatprep.subr.mxu0 0.0
    %790 = vmatpush2.xpose.msra.mxu0 0.0
    %791 = vmatprep.subr.mxu0 0.0
    %792 = vmatpush2.xpose.msra.mxu0 0.0
    %793 = vmatprep.subr.mxu0 0.0
    %794 = vmatpush2.xpose.msra.mxu0 0.0
    %795 = vmatprep.subr.mxu0 0.0
    %796 = vmatpush2.xpose.msra.mxu0 0.0
    %797 = vmatprep.subr.mxu0 0.0
    %798 = vmatpush2.xpose.msra.mxu0 0.0
    %799 = vmatprep.subr.mxu0 0.0
    %800 = vmatpush2.xpose.msra.mxu0 0.0
    %801 = vmatprep.mubr.f32.mxu0 0.0
    %802 = vmatmul.mubr.f32.gmra.mxu0 %v733
    %v803 = vpop.f32.mrf.mxu0
    %v804 = vadd.f32 0.0, %v803
    %v805 = vpop.f32.mrf.mxu0
    %806 = vdwg.mxu0
    %v807 = vsel %vm478, %v726, -inf
    %808 = vmax.xlane.f32.xlu0 %v807
    %v809 = vpop.xlane.xlu0 %808
    %v810 = vsel %vm478, %v804, -inf
    %811 = vmax.xlane.f32.xlu0 %v810
    %v812 = vpop.xlane.xlu0 %811
    %v813 = vsub.f32 %v726, %v809
    %v814 = vsub.f32 %v804, %v812
    %v815 = vmul.f32 %v813, 1.442695
    %v816 = vpow.pop %v815
    %v817 = vmul.f32 %v814, 1.442695
    %v818 = vpow.pop %v817
    %v819 = vsel %vm478, %v816, 0.0
    %820 = vadd.xlane.f32.xlu0 %v819
    %v821 = vpop.xlane.xlu0 %820
    %v822 = vsel %vm478, %v818, 0.0
    %823 = vadd.xlane.f32.xlu0 %v822
    %v824 = vpop.xlane.xlu0 %823
    %v825 = vrcp.pop %v821
    %v826 = vmul.f32 %v816, %v825
    %v827 = vrcp.pop %v824
    %v828 = vmul.f32 %v818, %v827
    %830 = vrot.lane.b32.xlu0 %v316, 96
    %v831 = vpop.permute.xlu0 %830
    %v834 = vsel %vm478, %v826, 0
    %836 = vmatprep.subr.mxu0 0.0
    %837 = vmatpush1.msra.mxu0 0.0
    %838 = vmatprep.subr.mxu0 0.0
    %839 = vmatpush1.msra.mxu0 0.0
    %840 = vmatprep.subr.mxu0 0.0
    %841 = vmatpush1.msra.mxu0 0.0
    %842 = vmatprep.subr.mxu0 0.0
    %843 = vmatpush1.msra.mxu0 0.0
    %844 = vmatprep.subr.mxu0 0.0
    %845 = vmatpush1.msra.mxu0 0.0
    %846 = vmatprep.subr.mxu0 0.0
    %847 = vmatpush1.msra.mxu0 0.0
    %848 = vmatprep.subr.mxu0 0.0
    %849 = vmatpush1.msra.mxu0 0.0
    %850 = vmatprep.subr.mxu0 0.0
    %851 = vmatpush1.msra.mxu0 0.0
    %852 = vmatprep.subr.mxu0 0.0
    %853 = vmatpush1.msra.mxu0 0.0
    %854 = vmatprep.subr.mxu0 0.0
    %855 = vmatpush1.msra.mxu0 0.0
    %856 = vmatprep.subr.mxu0 0.0
    %857 = vmatpush1.msra.mxu0 0.0
    %858 = vmatprep.subr.mxu0 0.0
    %859 = vmatpush1.msra.mxu0 0.0
    %860 = vmatprep.subr.mxu0 0.0
    %861 = vmatpush1.msra.mxu0 0.0
    %862 = vmatprep.subr.mxu0 0.0
    %863 = vmatpush1.msra.mxu0 0.0
    %864 = vmatprep.subr.mxu0 0.0
    %865 = vmatpush1.msra.mxu0 0.0
    %866 = vmatprep.subr.mxu0 0.0
    %867 = vmatpush1.msra.mxu0 %v831
    %868 = vmatprep.subr.mxu0 0.0
    %869 = vmatpush2.msra.mxu0 0.0
    %870 = vmatprep.subr.mxu0 0.0
    %871 = vmatpush2.msra.mxu0 0.0
    %872 = vmatprep.subr.mxu0 0.0
    %873 = vmatpush2.msra.mxu0 0.0
    %874 = vmatprep.subr.mxu0 0.0
    %875 = vmatpush2.msra.mxu0 0.0
    %876 = vmatprep.subr.mxu0 0.0
    %877 = vmatpush2.msra.mxu0 0.0
    %878 = vmatprep.subr.mxu0 0.0
    %879 = vmatpush2.msra.mxu0 0.0
    %880 = vmatprep.subr.mxu0 0.0
    %881 = vmatpush2.msra.mxu0 0.0
    %882 = vmatprep.subr.mxu0 0.0
    %883 = vmatpush2.msra.mxu0 0.0
    %884 = vmatprep.subr.mxu0 0.0
    %885 = vmatpush2.msra.mxu0 0.0
    %886 = vmatprep.subr.mxu0 0.0
    %887 = vmatpush2.msra.mxu0 0.0
    %888 = vmatprep.subr.mxu0 0.0
    %889 = vmatpush2.msra.mxu0 0.0
    %890 = vmatprep.subr.mxu0 0.0
    %891 = vmatpush2.msra.mxu0 0.0
    %892 = vmatprep.subr.mxu0 0.0
    %893 = vmatpush2.msra.mxu0 0.0
    %894 = vmatprep.subr.mxu0 0.0
    %895 = vmatpush2.msra.mxu0 0.0
    %896 = vmatprep.subr.mxu0 0.0
    %897 = vmatpush2.msra.mxu0 0.0
    %898 = vmatprep.subr.mxu0 0.0
    %899 = vmatpush2.msra.mxu0 0.0
    %900 = vmatprep.mubr.f32.mxu0 0.0
    %901 = vmatmul.mubr.f32.gmra.mxu0 %v834
    %v902 = vpop.f32.mrf.mxu0
    %v903 = vadd.f32 0.0, %v902
    %v904 = vpop.f32.mrf.mxu0
    %905 = vdwg.mxu0
    %907 = vrot.lane.b32.xlu0 %v322, 96
    %v908 = vpop.permute.xlu0 %907
    %v911 = vsel %vm478, %v828, 0
    %913 = vmatprep.subr.mxu0 0.0
    %914 = vmatpush1.msra.mxu0 0.0
    %915 = vmatprep.subr.mxu0 0.0
    %916 = vmatpush1.msra.mxu0 0.0
    %917 = vmatprep.subr.mxu0 0.0
    %918 = vmatpush1.msra.mxu0 0.0
    %919 = vmatprep.subr.mxu0 0.0
    %920 = vmatpush1.msra.mxu0 0.0
    %921 = vmatprep.subr.mxu0 0.0
    %922 = vmatpush1.msra.mxu0 0.0
    %923 = vmatprep.subr.mxu0 0.0
    %924 = vmatpush1.msra.mxu0 0.0
    %925 = vmatprep.subr.mxu0 0.0
    %926 = vmatpush1.msra.mxu0 0.0
    %927 = vmatprep.subr.mxu0 0.0
    %928 = vmatpush1.msra.mxu0 0.0
    %929 = vmatprep.subr.mxu0 0.0
    %930 = vmatpush1.msra.mxu0 0.0
    %931 = vmatprep.subr.mxu0 0.0
    %932 = vmatpush1.msra.mxu0 0.0
    %933 = vmatprep.subr.mxu0 0.0
    %934 = vmatpush1.msra.mxu0 0.0
    %935 = vmatprep.subr.mxu0 0.0
    %936 = vmatpush1.msra.mxu0 0.0
    %937 = vmatprep.subr.mxu0 0.0
    %938 = vmatpush1.msra.mxu0 0.0
    %939 = vmatprep.subr.mxu0 0.0
    %940 = vmatpush1.msra.mxu0 0.0
    %941 = vmatprep.subr.mxu0 0.0
    %942 = vmatpush1.msra.mxu0 0.0
    %943 = vmatprep.subr.mxu0 0.0
    %944 = vmatpush1.msra.mxu0 %v908
    %945 = vmatprep.subr.mxu0 0.0
    %946 = vmatpush2.msra.mxu0 0.0
    %947 = vmatprep.subr.mxu0 0.0
    %948 = vmatpush2.msra.mxu0 0.0
    %949 = vmatprep.subr.mxu0 0.0
    %950 = vmatpush2.msra.mxu0 0.0
    %951 = vmatprep.subr.mxu0 0.0
    %952 = vmatpush2.msra.mxu0 0.0
    %953 = vmatprep.subr.mxu0 0.0
    %954 = vmatpush2.msra.mxu0 0.0
    %955 = vmatprep.subr.mxu0 0.0
    %956 = vmatpush2.msra.mxu0 0.0
    %957 = vmatprep.subr.mxu0 0.0
    %958 = vmatpush2.msra.mxu0 0.0
    %959 = vmatprep.subr.mxu0 0.0
    %960 = vmatpush2.msra.mxu0 0.0
    %961 = vmatprep.subr.mxu0 0.0
    %962 = vmatpush2.msra.mxu0 0.0
    %963 = vmatprep.subr.mxu0 0.0
    %964 = vmatpush2.msra.mxu0 0.0
    %965 = vmatprep.subr.mxu0 0.0
    %966 = vmatpush2.msra.mxu0 0.0
    %967 = vmatprep.subr.mxu0 0.0
    %968 = vmatpush2.msra.mxu0 0.0
    %969 = vmatprep.subr.mxu0 0.0
    %970 = vmatpush2.msra.mxu0 0.0
    %971 = vmatprep.subr.mxu0 0.0
    %972 = vmatpush2.msra.mxu0 0.0
    %973 = vmatprep.subr.mxu0 0.0
    %974 = vmatpush2.msra.mxu0 0.0
    %975 = vmatprep.subr.mxu0 0.0
    %976 = vmatpush2.msra.mxu0 0.0
    %977 = vmatprep.mubr.f32.mxu0 0.0
    %978 = vmatmul.mubr.f32.gmra.mxu0 %v911
    %v979 = vpop.f32.mrf.mxu0
    %v980 = vadd.f32 0.0, %v979
    %v981 = vpop.f32.mrf.mxu0
    %982 = vdwg.mxu0
    %v983 = vld [vmem:[%s10 + $0x20] sm:$0xff]
    %v984 = vld [vmem:[%s10 + $0x28] sm:$0xff]
    %v985 = vld [vmem:[%s10 + $0x30] sm:$0xff]
    %v986 = vld [vmem:[%s10 + $0x38] sm:$0xff]
    %v988 = vsel %vm78, %v903, 0
    %v991 = vsel %vm78, %v980, 0
    %993 = vmatprep.subr.mxu0 0.0
    %994 = vmatpush1.msra.mxu0 0.0
    %995 = vmatprep.subr.mxu0 0.0
    %996 = vmatpush1.msra.mxu0 0.0
    %997 = vmatprep.subr.mxu0 0.0
    %998 = vmatpush1.msra.mxu0 0.0
    %999 = vmatprep.subr.mxu0 0.0
    %1000 = vmatpush1.msra.mxu0 0.0
    %1001 = vmatprep.subr.mxu0 0.0
    %1002 = vmatpush1.msra.mxu0 0.0
    %1003 = vmatprep.subr.mxu0 0.0
    %1004 = vmatpush1.msra.mxu0 0.0
    %1005 = vmatprep.subr.mxu0 0.0
    %1006 = vmatpush1.msra.mxu0 0.0
    %1007 = vmatprep.subr.mxu0 0.0
    %1008 = vmatpush1.msra.mxu0 0.0
    %1009 = vmatprep.subr.mxu0 0.0
    %1010 = vmatpush1.msra.mxu0 0.0
    %1011 = vmatprep.subr.mxu0 0.0
    %1012 = vmatpush1.msra.mxu0 0.0
    %1013 = vmatprep.subr.mxu0 0.0
    %1014 = vmatpush1.msra.mxu0 0.0
    %1015 = vmatprep.subr.mxu0 0.0
    %1016 = vmatpush1.msra.mxu0 0.0
    %1017 = vmatprep.subr.mxu0 0.0
    %1018 = vmatpush1.msra.mxu0 %v986
    %1019 = vmatprep.subr.mxu0 0.0
    %1020 = vmatpush1.msra.mxu0 %v985
    %1021 = vmatprep.subr.mxu0 0.0
    %1022 = vmatpush1.msra.mxu0 %v984
    %1023 = vmatprep.subr.mxu0 0.0
    %1024 = vmatpush1.msra.mxu0 %v983
    %1025 = vmatprep.subr.mxu0 0.0
    %1026 = vmatpush2.msra.mxu0 0.0
    %1027 = vmatprep.subr.mxu0 0.0
    %1028 = vmatpush2.msra.mxu0 0.0
    %1029 = vmatprep.subr.mxu0 0.0
    %1030 = vmatpush2.msra.mxu0 0.0
    %1031 = vmatprep.subr.mxu0 0.0
    %1032 = vmatpush2.msra.mxu0 0.0
    %1033 = vmatprep.subr.mxu0 0.0
    %1034 = vmatpush2.msra.mxu0 0.0
    %1035 = vmatprep.subr.mxu0 0.0
    %1036 = vmatpush2.msra.mxu0 0.0
    %1037 = vmatprep.subr.mxu0 0.0
    %1038 = vmatpush2.msra.mxu0 0.0
    %1039 = vmatprep.subr.mxu0 0.0
    %1040 = vmatpush2.msra.mxu0 0.0
    %1041 = vmatprep.subr.mxu0 0.0
    %1042 = vmatpush2.msra.mxu0 0.0
    %1043 = vmatprep.subr.mxu0 0.0
    %1044 = vmatpush2.msra.mxu0 0.0
    %1045 = vmatprep.subr.mxu0 0.0
    %1046 = vmatpush2.msra.mxu0 0.0
    %1047 = vmatprep.subr.mxu0 0.0
    %1048 = vmatpush2.msra.mxu0 0.0
    %1049 = vmatprep.subr.mxu0 0.0
    %1050 = vmatpush2.msra.mxu0 0.0
    %1051 = vmatprep.subr.mxu0 0.0
    %1052 = vmatpush2.msra.mxu0 0.0
    %1053 = vmatprep.subr.mxu0 0.0
    %1054 = vmatpush2.msra.mxu0 0.0
    %1055 = vmatprep.subr.mxu0 0.0
    %1056 = vmatpush2.msra.mxu0 0.0
    %1057 = vmatprep.mubr.f32.mxu0 0.0
    %1058 = vmatmul.mubr.f32.gmra.mxu0 %v988
    %v1059 = vpop.f32.mrf.mxu0
    %v1060 = vadd.f32 0.0, %v1059
    %v1061 = vpop.f32.mrf.mxu0
    %1062 = vmatprep.mubr.f32.mxu0 0.0
    %1063 = vmatmul.mubr.f32.gmra.mxu0 %v991
    %v1064 = vpop.f32.mrf.mxu0
    %v1065 = vadd.f32 0.0, %v1064
    %v1066 = vpop.f32.mrf.mxu0
    %1067 = vdwg.mxu0
    %v1069 = vsel %vm78, %v571, 0
    %v1072 = vsel %vm78, %v644, 0
    %1074 = vmatprep.subr.mxu0 0.0
    %1075 = vmatpush1.msra.mxu0 0.0
    %1076 = vmatprep.subr.mxu0 0.0
    %1077 = vmatpush1.msra.mxu0 0.0
    %1078 = vmatprep.subr.mxu0 0.0
    %1079 = vmatpush1.msra.mxu0 0.0
    %1080 = vmatprep.subr.mxu0 0.0
    %1081 = vmatpush1.msra.mxu0 0.0
    %1082 = vmatprep.subr.mxu0 0.0
    %1083 = vmatpush1.msra.mxu0 0.0
    %1084 = vmatprep.subr.mxu0 0.0
    %1085 = vmatpush1.msra.mxu0 0.0
    %1086 = vmatprep.subr.mxu0 0.0
    %1087 = vmatpush1.msra.mxu0 0.0
    %1088 = vmatprep.subr.mxu0 0.0
    %1089 = vmatpush1.msra.mxu0 0.0
    %1090 = vmatprep.subr.mxu0 0.0
    %1091 = vmatpush1.msra.mxu0 0.0
    %1092 = vmatprep.subr.mxu0 0.0
    %1093 = vmatpush1.msra.mxu0 0.0
    %1094 = vmatprep.subr.mxu0 0.0
    %1095 = vmatpush1.msra.mxu0 0.0
    %1096 = vmatprep.subr.mxu0 0.0
    %1097 = vmatpush1.msra.mxu0 0.0
    %1098 = vmatprep.subr.mxu0 0.0
    %1099 = vmatpush1.msra.mxu0 %v650
    %1100 = vmatprep.subr.mxu0 0.0
    %1101 = vmatpush1.msra.mxu0 %v649
    %1102 = vmatprep.subr.mxu0 0.0
    %1103 = vmatpush1.msra.mxu0 %v648
    %1104 = vmatprep.subr.mxu0 0.0
    %1105 = vmatpush1.msra.mxu0 %v647
    %1106 = vmatprep.subr.mxu0 0.0
    %1107 = vmatpush2.msra.mxu0 0.0
    %1108 = vmatprep.subr.mxu0 0.0
    %1109 = vmatpush2.msra.mxu0 0.0
    %1110 = vmatprep.subr.mxu0 0.0
    %1111 = vmatpush2.msra.mxu0 0.0
    %1112 = vmatprep.subr.mxu0 0.0
    %1113 = vmatpush2.msra.mxu0 0.0
    %1114 = vmatprep.subr.mxu0 0.0
    %1115 = vmatpush2.msra.mxu0 0.0
    %1116 = vmatprep.subr.mxu0 0.0
    %1117 = vmatpush2.msra.mxu0 0.0
    %1118 = vmatprep.subr.mxu0 0.0
    %1119 = vmatpush2.msra.mxu0 0.0
    %1120 = vmatprep.subr.mxu0 0.0
    %1121 = vmatpush2.msra.mxu0 0.0
    %1122 = vmatprep.subr.mxu0 0.0
    %1123 = vmatpush2.msra.mxu0 0.0
    %1124 = vmatprep.subr.mxu0 0.0
    %1125 = vmatpush2.msra.mxu0 0.0
    %1126 = vmatprep.subr.mxu0 0.0
    %1127 = vmatpush2.msra.mxu0 0.0
    %1128 = vmatprep.subr.mxu0 0.0
    %1129 = vmatpush2.msra.mxu0 0.0
    %1130 = vmatprep.subr.mxu0 0.0
    %1131 = vmatpush2.msra.mxu0 0.0
    %1132 = vmatprep.subr.mxu0 0.0
    %1133 = vmatpush2.msra.mxu0 0.0
    %1134 = vmatprep.subr.mxu0 0.0
    %1135 = vmatpush2.msra.mxu0 0.0
    %1136 = vmatprep.subr.mxu0 0.0
    %1137 = vmatpush2.msra.mxu0 0.0
    %1138 = vmatprep.mubr.f32.mxu0 0.0
    %1139 = vmatmul.mubr.f32.gmra.mxu0 %v1069
    %v1140 = vpop.f32.mrf.mxu0
    %v1141 = vadd.f32 %v1060, %v1140
    %v1142 = vpop.f32.mrf.mxu0
    %1143 = vmatprep.mubr.f32.mxu0 0.0
    %1144 = vmatmul.mubr.f32.gmra.mxu0 %v1072
    %v1145 = vpop.f32.mrf.mxu0
    %v1146 = vadd.f32 %v1065, %v1145
    %v1147 = vpop.f32.mrf.mxu0
    %1148 = vdwg.mxu0
    %v1149 = vld [vmem:[%s11] sm:$0x1]
    %v1151 = vlaneseq
    %v1152 = vshrl.u32 %v1151, 7
    %v1153 = vsub.s32 0, %v1152
    %v1154 = vrot.slane %v1149, %v1153
    %v1156 = vadd.f32 %v1141, %v1154
    %v1157 = vadd.f32 %v1146, %v1154
    %1158 = vrot.lane.b32.xlu0 %v152, 64
    %v1159 = vpop.permute.xlu0 %1158
    %1160 = vrot.lane.b32.xlu0 %v158, 64
    %v1161 = vpop.permute.xlu0 %1160
    %v1164 = vmul.f32 %v1156, %v1159
    %v1165 = vmul.f32 %v1157, %v1161
    %v1166 = vadd.f32 %v54, %v1164
    %v1167 = vadd.f32 %v55, %v1165
    %v1168 = vld [vmem:[%s6] sm:$0x1]
    %v1169 = vld [vmem:[%s7] sm:$0x1]
    %v1170 = vsel %vm78, %v1166, 0.0
    %1171 = vadd.xlane.f32.xlu0 %v1170
    %v1172 = vpop.xlane.xlu0 %1171
    %v1173 = vsel %vm78, %v1167, 0.0
    %1174 = vadd.xlane.f32.xlu0 %v1173
    %v1175 = vpop.xlane.xlu0 %1174
    %v1176 = vmul.f32 %v1172, %v170
    %v1177 = vmul.f32 %v1175, %v170
    %v1178 = vsub.f32 %v1166, %v1176
    %v1179 = vsub.f32 %v1167, %v1177
    %v1180 = vmul.f32 %v1178, %v1178
    %v1181 = vmul.f32 %v1179, %v1179
    %v1182 = vsel %vm78, %v1180, 0.0
    %1183 = vadd.xlane.f32.xlu0 %v1182
    %v1184 = vpop.xlane.xlu0 %1183
    %v1185 = vsel %vm78, %v1181, 0.0
    %1186 = vadd.xlane.f32.xlu0 %v1185
    %v1187 = vpop.xlane.xlu0 %1186
    %v1188 = vmul.f32 %v1184, %v170
    %v1189 = vmul.f32 %v1187, %v170
    %v1190 = vadd.f32 %v1188, 1e-05
    %v1191 = vadd.f32 %v1189, 1e-05
    %v1192 = vrsqrt.pop %v1190
    %v1193 = vrsqrt.pop %v1191
    %v1194 = vmul.f32 %v1178, %v1192
    %v1195 = vmul.f32 %v1179, %v1193
    %v1197 = vlaneseq
    %v1198 = vshrl.u32 %v1197, 7
    %v1199 = vsub.s32 0, %v1198
    %v1200 = vrot.slane %v1168, %v1199
    %v1202 = vmul.f32 %v1194, %v1200
    %v1203 = vmul.f32 %v1195, %v1200
    %v1205 = vlaneseq
    %v1206 = vshrl.u32 %v1205, 7
    %v1207 = vsub.s32 0, %v1206
    %v1208 = vrot.slane %v1169, %v1207
    %v1210 = vadd.f32 %v1202, %v1208
    %v1211 = vadd.f32 %v1203, %v1208
    %1214 = vrot.lane.b32.xlu0 %v207, 32
    %v1215 = vpop.permute.xlu0 %1214
    %1216 = vrot.lane.b32.xlu0 %v208, 32
    %v1217 = vpop.permute.xlu0 %1216
    %v1220 = vmul.f32 %v1210, %v1215
    %v1221 = vmul.f32 %v1211, %v1217
    %v1222 = vadd.f32 %v1220, %v154
    %v1223 = vadd.f32 %v1221, %v160
    %v1224 = vld [vmem:[%s12] sm:$0xff]
    %v1225 = vld [vmem:[%s12 + $0x8] sm:$0xff]
    %v1226 = vld [vmem:[%s12 + $0x10] sm:$0xff]
    %v1227 = vld [vmem:[%s12 + $0x18] sm:$0xff]
    %v1228 = vld [vmem:[%s13] sm:$0x1]
    %v1230 = vlaneseq
    %v1231 = vshrl.u32 %v1230, 7
    %v1232 = vsub.s32 0, %v1231
    %v1233 = vrot.slane %v1228, %v1232
    %v1236 = vsel %vm78, %v1222, 0
    %v1239 = vsel %vm78, %v1223, 0
    %1241 = vmatprep.subr.mxu0 0.0
    %1242 = vmatpush1.msra.mxu0 0.0
    %1243 = vmatprep.subr.mxu0 0.0
    %1244 = vmatpush1.msra.mxu0 0.0
    %1245 = vmatprep.subr.mxu0 0.0
    %1246 = vmatpush1.msra.mxu0 0.0
    %1247 = vmatprep.subr.mxu0 0.0
    %1248 = vmatpush1.msra.mxu0 0.0
    %1249 = vmatprep.subr.mxu0 0.0
    %1250 = vmatpush1.msra.mxu0 0.0
    %1251 = vmatprep.subr.mxu0 0.0
    %1252 = vmatpush1.msra.mxu0 0.0
    %1253 = vmatprep.subr.mxu0 0.0
    %1254 = vmatpush1.msra.mxu0 0.0
    %1255 = vmatprep.subr.mxu0 0.0
    %1256 = vmatpush1.msra.mxu0 0.0
    %1257 = vmatprep.subr.mxu0 0.0
    %1258 = vmatpush1.msra.mxu0 0.0
    %1259 = vmatprep.subr.mxu0 0.0
    %1260 = vmatpush1.msra.mxu0 0.0
    %1261 = vmatprep.subr.mxu0 0.0
    %1262 = vmatpush1.msra.mxu0 0.0
    %1263 = vmatprep.subr.mxu0 0.0
    %1264 = vmatpush1.msra.mxu0 0.0
    %1265 = vmatprep.subr.mxu0 0.0
    %1266 = vmatpush1.msra.mxu0 %v1227
    %1267 = vmatprep.subr.mxu0 0.0
    %1268 = vmatpush1.msra.mxu0 %v1226
    %1269 = vmatprep.subr.mxu0 0.0
    %1270 = vmatpush1.msra.mxu0 %v1225
    %1271 = vmatprep.subr.mxu0 0.0
    %1272 = vmatpush1.msra.mxu0 %v1224
    %1273 = vmatprep.subr.mxu0 0.0
    %1274 = vmatpush2.msra.mxu0 0.0
    %1275 = vmatprep.subr.mxu0 0.0
    %1276 = vmatpush2.msra.mxu0 0.0
    %1277 = vmatprep.subr.mxu0 0.0
    %1278 = vmatpush2.msra.mxu0 0.0
    %1279 = vmatprep.subr.mxu0 0.0
    %1280 = vmatpush2.msra.mxu0 0.0
    %1281 = vmatprep.subr.mxu0 0.0
    %1282 = vmatpush2.msra.mxu0 0.0
    %1283 = vmatprep.subr.mxu0 0.0
    %1284 = vmatpush2.msra.mxu0 0.0
    %1285 = vmatprep.subr.mxu0 0.0
    %1286 = vmatpush2.msra.mxu0 0.0
    %1287 = vmatprep.subr.mxu0 0.0
    %1288 = vmatpush2.msra.mxu0 0.0
    %1289 = vmatprep.subr.mxu0 0.0
    %1290 = vmatpush2.msra.mxu0 0.0
    %1291 = vmatprep.subr.mxu0 0.0
    %1292 = vmatpush2.msra.mxu0 0.0
    %1293 = vmatprep.subr.mxu0 0.0
    %1294 = vmatpush2.msra.mxu0 0.0
    %1295 = vmatprep.subr.mxu0 0.0
    %1296 = vmatpush2.msra.mxu0 0.0
    %1297 = vmatprep.subr.mxu0 0.0
    %1298 = vmatpush2.msra.mxu0 0.0
    %1299 = vmatprep.subr.mxu0 0.0
    %1300 = vmatpush2.msra.mxu0 0.0
    %1301 = vmatprep.subr.mxu0 0.0
    %1302 = vmatpush2.msra.mxu0 0.0
    %1303 = vmatprep.subr.mxu0 0.0
    %1304 = vmatpush2.msra.mxu0 0.0
    %1305 = vmatprep.mubr.f32.mxu0 0.0
    %1306 = vmatmul.mubr.f32.gmra.mxu0 %v1236
    %v1307 = vpop.f32.mrf.mxu0
    %v1308 = vadd.f32 %v1233, %v1307
    %v1309 = vpop.f32.mrf.mxu0
    %1310 = vmatprep.mubr.f32.mxu0 0.0
    %1311 = vmatmul.mubr.f32.gmra.mxu0 %v1239
    %v1312 = vpop.f32.mrf.mxu0
    %v1313 = vadd.f32 %v1233, %v1312
    %v1314 = vpop.f32.mrf.mxu0
    %1315 = vdwg.mxu0
    %v1316 = vmax.f32 %v1308, 0.0
    %v1317 = vmax.f32 %v1313, 0.0
    %v1318 = vld [vmem:[%s14] sm:$0xff]
    %v1319 = vld [vmem:[%s14 + $0x8] sm:$0xff]
    %v1320 = vld [vmem:[%s14 + $0x10] sm:$0xff]
    %v1321 = vld [vmem:[%s14 + $0x18] sm:$0xff]
    %v1322 = vld [vmem:[%s14 + $0x20] sm:$0xff]
    %v1323 = vld [vmem:[%s14 + $0x28] sm:$0xff]
    %v1324 = vld [vmem:[%s14 + $0x30] sm:$0xff]
    %v1325 = vld [vmem:[%s14 + $0x38] sm:$0xff]
    %v1326 = vld [vmem:[%s14 + $0x40] sm:$0xff]
    %v1327 = vld [vmem:[%s14 + $0x48] sm:$0xff]
    %v1328 = vld [vmem:[%s14 + $0x50] sm:$0xff]
    %v1329 = vld [vmem:[%s14 + $0x58] sm:$0xff]
    %v1330 = vld [vmem:[%s14 + $0x60] sm:$0xff]
    %v1331 = vld [vmem:[%s14 + $0x68] sm:$0xff]
    %v1332 = vld [vmem:[%s14 + $0x70] sm:$0xff]
    %v1333 = vld [vmem:[%s14 + $0x78] sm:$0xff]
    %v1334 = vld [vmem:[%s15] sm:$0x1]
    %v1336 = vlaneseq
    %v1337 = vshrl.u32 %v1336, 7
    %v1338 = vsub.s32 0, %v1337
    %v1339 = vrot.slane %v1334, %v1338
    %1341 = vmatprep.subr.mxu0 0.0
    %1342 = vmatpush1.msra.mxu0 %v1333
    %1343 = vmatprep.subr.mxu0 0.0
    %1344 = vmatpush1.msra.mxu0 %v1332
    %1345 = vmatprep.subr.mxu0 0.0
    %1346 = vmatpush1.msra.mxu0 %v1331
    %1347 = vmatprep.subr.mxu0 0.0
    %1348 = vmatpush1.msra.mxu0 %v1330
    %1349 = vmatprep.subr.mxu0 0.0
    %1350 = vmatpush1.msra.mxu0 %v1329
    %1351 = vmatprep.subr.mxu0 0.0
    %1352 = vmatpush1.msra.mxu0 %v1328
    %1353 = vmatprep.subr.mxu0 0.0
    %1354 = vmatpush1.msra.mxu0 %v1327
    %1355 = vmatprep.subr.mxu0 0.0
    %1356 = vmatpush1.msra.mxu0 %v1326
    %1357 = vmatprep.subr.mxu0 0.0
    %1358 = vmatpush1.msra.mxu0 %v1325
    %1359 = vmatprep.subr.mxu0 0.0
    %1360 = vmatpush1.msra.mxu0 %v1324
    %1361 = vmatprep.subr.mxu0 0.0
    %1362 = vmatpush1.msra.mxu0 %v1323
    %1363 = vmatprep.subr.mxu0 0.0
    %1364 = vmatpush1.msra.mxu0 %v1322
    %1365 = vmatprep.subr.mxu0 0.0
    %1366 = vmatpush1.msra.mxu0 %v1321
    %1367 = vmatprep.subr.mxu0 0.0
    %1368 = vmatpush1.msra.mxu0 %v1320
    %1369 = vmatprep.subr.mxu0 0.0
    %1370 = vmatpush1.msra.mxu0 %v1319
    %1371 = vmatprep.subr.mxu0 0.0
    %1372 = vmatpush1.msra.mxu0 %v1318
    %1373 = vmatprep.subr.mxu0 0.0
    %1374 = vmatpush2.msra.mxu0 0.0
    %1375 = vmatprep.subr.mxu0 0.0
    %1376 = vmatpush2.msra.mxu0 0.0
    %1377 = vmatprep.subr.mxu0 0.0
    %1378 = vmatpush2.msra.mxu0 0.0
    %1379 = vmatprep.subr.mxu0 0.0
    %1380 = vmatpush2.msra.mxu0 0.0
    %1381 = vmatprep.subr.mxu0 0.0
    %1382 = vmatpush2.msra.mxu0 0.0
    %1383 = vmatprep.subr.mxu0 0.0
    %1384 = vmatpush2.msra.mxu0 0.0
    %1385 = vmatprep.subr.mxu0 0.0
    %1386 = vmatpush2.msra.mxu0 0.0
    %1387 = vmatprep.subr.mxu0 0.0
    %1388 = vmatpush2.msra.mxu0 0.0
    %1389 = vmatprep.subr.mxu0 0.0
    %1390 = vmatpush2.msra.mxu0 0.0
    %1391 = vmatprep.subr.mxu0 0.0
    %1392 = vmatpush2.msra.mxu0 0.0
    %1393 = vmatprep.subr.mxu0 0.0
    %1394 = vmatpush2.msra.mxu0 0.0
    %1395 = vmatprep.subr.mxu0 0.0
    %1396 = vmatpush2.msra.mxu0 0.0
    %1397 = vmatprep.subr.mxu0 0.0
    %1398 = vmatpush2.msra.mxu0 0.0
    %1399 = vmatprep.subr.mxu0 0.0
    %1400 = vmatpush2.msra.mxu0 0.0
    %1401 = vmatprep.subr.mxu0 0.0
    %1402 = vmatpush2.msra.mxu0 0.0
    %1403 = vmatprep.subr.mxu0 0.0
    %1404 = vmatpush2.msra.mxu0 0.0
    %1405 = vmatprep.mubr.f32.mxu0 0.0
    %1406 = vmatmul.mubr.f32.gmra.mxu0 %v1316
    %v1407 = vpop.f32.mrf.mxu0
    %v1408 = vadd.f32 %v1339, %v1407
    %v1409 = vpop.f32.mrf.mxu0
    %1410 = vmatprep.mubr.f32.mxu0 0.0
    %1411 = vmatmul.mubr.f32.gmra.mxu0 %v1317
    %v1412 = vpop.f32.mrf.mxu0
    %v1413 = vadd.f32 %v1339, %v1412
    %v1414 = vpop.f32.mrf.mxu0
    %1415 = vdwg.mxu0
    %1418 = vrot.lane.b32.xlu0 %v154, 96
    %v1419 = vpop.permute.xlu0 %1418
    %1420 = vrot.lane.b32.xlu0 %v160, 96
    %v1421 = vpop.permute.xlu0 %1420
    %v1424 = vmul.f32 %v1408, %v1419
    %v1425 = vmul.f32 %v1413, %v1421
    %v1426 = vadd.f32 %v1166, %v1424
    %v1427 = vadd.f32 %v1167, %v1425
    %1428 = vst.msk [vmem:[#allocation2] sm:$0xff] %vm78, %v1426
    %1429 = vst.msk [vmem:[#allocation2 + $0x8] sm:$0xff] %vm78, %v1427
    // Predicated region
    $region66: #{tpu_custom_call.1} parent=1 // pred_check
      _
    $region67: #{tpu_custom_call.1} parent=1 // pred_check_branch
      %1431 = sbr.rel (0) target = $region69
    $region68: #{tpu_custom_call.1} parent=1 // pred_region
      %s1433 = ssub.s32 256, 256
      %1434 = vsyncadd [#allocation3], %s1433
      %s1435 = sshll.u32 [#allocation2], 4
      %s1436 = int_to_ptr.vmem [resolvable:$true] %s1435
      %1441 = dma.vmem_to_hbm [thread:$0]  %s1436, 256, %s16, [#allocation3], 128, 128, 8
    $region69: #{tpu_custom_call.1} parent=1 // pred_fallthru
      _
    // Predicated region
    $region70: #{tpu_custom_call.1} parent=1 // pred_check
      _
    $region71: #{tpu_custom_call.1} parent=1 // pred_check_branch
      %1443 = sbr.rel (0) target = $region73
    $region72: #{tpu_custom_call.1} parent=1 // pred_region
      %1444 = dma.done [#allocation3], 256
    $region73: #{tpu_custom_call.1} parent=1 // pred_fallthru
      _
    %1445 = vsyncpa [#allocation3], 1

</llo_original>
